<compile_context>
chip_gen: v7x
topology: tpu7x:2x2x1
jax: 0.10.0
libtpu: 0.0.40
codegen_flags: <defaults>
</compile_context>

<pallas_src>
import functools

import jax
import jax.numpy as jnp
from jax import lax
from jax.experimental import pallas as pl
from jax.experimental.pallas import tpu as pltpu

EPS = 1e-5
LANE = 128
_BRANCH_NAMES = ('d5', 'd4', 'd3', 'd2')


def _round_up(x, m):
    return (x + m - 1) // m * m


def _vmem_limit_bytes(needed):
    """Scoped-VMEM request: actual need (with headroom) capped at 75% of physical."""
    try:
        phys = int(pltpu.get_tpu_info().vmem_capacity_bytes)
    except Exception:
        phys = 64 << 20                       # conservative fallback: v7x per-core
    cap = (phys * 3) // 4                     # leave headroom for compiler scratch
    return int(min(max(needed, 16 << 20), cap))


# ---------------- Pallas kernel (fused conv + training-BN + ReLU per branch) ----------------

def grm_branch_kernel(s_ref, w_ref, gamma_ref, beta_ref, o_ref, col_ref, y_ref, *,
                      n_imgs, cin_p, wp, w_img, hwp, m_lanes, inv_count):
    """One branch (all its images) per grid step.

    s_ref:     (N, Cin_p8, Lpad)  bf16   flattened zero-padded slab, pixels on lanes
    w_ref:     (Cout_p8, 9*Cin_p8) f32   taps, k = (dy*3+dx)*Cin_p8 + ci
    gamma_ref: (Cout_p8, 1) f32          BN gamma (padded channels are zero)
    beta_ref:  (Cout_p8, 1) f32          BN beta
    o_ref:     (N, Cout_p8, Mlanes) f32  ReLU(BN(conv)), pixel r = oy*Wp + ox
    col_ref:   (9*Cin_p8, Mlanes) f32    VMEM im2col scratch (built once per image)
    y_ref:     (N, Cout_p8, Mlanes) f32  VMEM pre-BN conv outputs
    """
    cout_p = w_ref.shape[0]
    wmat = w_ref[...]                                       # resident, tiny

    # Valid-pixel mask (generated in-kernel, no DMA): r = oy*Wp + ox is a real
    # output pixel iff r < H*Wp and (r % Wp) < W.
    lane = lax.broadcasted_iota(jnp.int32, (cout_p, m_lanes), 1)
    valid = ((lane % wp) < w_img) & (lane < hwp)

    s1 = jnp.zeros((cout_p, 1), jnp.float32)
    s2 = jnp.zeros((cout_p, 1), jnp.float32)

    for n in range(n_imgs):
        # Build the im2col tile once: 9 lane-shifted views of the slab, each a
        # sublane-aligned (Cin_p8, Mlanes) store into the f32 scratch.
        for t in range(9):
            dy, dx = divmod(t, 3)
            sh = dy * wp + dx
            col_ref[t * cin_p:(t + 1) * cin_p, :] = (
                s_ref[n, :, sh:sh + m_lanes].astype(jnp.float32))
        # Single MXU matmul with fused K = 9*Cin_p8.
        y = jnp.dot(wmat, col_ref[...], preferred_element_type=jnp.float32)
        y_ref[n] = y
        # Per-channel moments over the valid pixels only.
        # TODO(synk): if |mean| >> std becomes a concern, accumulate moments of
        # (y - c) with a cheap per-channel offset instead of raw E[y^2]-E[y]^2.
        yv = jnp.where(valid, y, 0.0)
        s1 = s1 + jnp.sum(yv, axis=1, keepdims=True)
        s2 = s2 + jnp.sum(yv * y, axis=1, keepdims=True)

    # Fold training-mode BN into scale/shift (biased variance, as PyTorch).
    mean = s1 * inv_count
    var = jnp.maximum(s2 * inv_count - mean * mean, 0.0)
    scale = gamma_ref[...] * lax.rsqrt(var + EPS)            # (Cout_p8, 1)
    shift = beta_ref[...] - mean * scale

    for n in range(n_imgs):
        o_ref[n] = jnp.maximum(y_ref[n] * scale + shift, 0.0)


# ---------------- wrapper: one stacked group of same-shape branches ----------------

def _branches_conv_bn_relu(x, x_p, w, gamma, beta):
    """Fused add + 3x3 SAME conv + training-mode BN + ReLU for B stacked branches.

    x, x_p: (B, N, Cin, H, W) f32   w: (B, 3, 3, Cin, Cout) f32 (HWIO)
    gamma, beta: (B, Cout) f32      returns (B, N, Cout, H, W) f32
    """
    B, N, Cin, H, W = x.shape
    Cout = w.shape[-1]
    Hp, Wp = H + 2, W + 2
    Cin_p = _round_up(Cin, 8)                 # sublane-aligned input channels
    Cout_p = _round_up(Cout, 8)               # sublane-aligned output channels
    M = H * Wp                                # flattened output pixels (incl. pad cols)
    Mlanes = _round_up(M, LANE)               # lane-dense output width
    Lpad = _round_up(Mlanes + 2 * Wp + 2, LANE)  # slab length (covers max tap shift)
    K = 9 * Cin_p

    # TODO(synk): for large N*H*W where the (N, Cout_p8, Mlanes) f32 VMEM scratch
    # (or the col scratch) exceeds the per-core VMEM budget, split into row chunks
    # with 2-row halos and fall back to a two-pass (stats, then apply) structure.

    # ---- plain-JAX glue (layout only; no transpose needed for NCHW inputs) ----
    s = x + x_p                                                  # (B,N,Cin,H,W)
    s = jnp.pad(s, ((0, 0), (0, 0), (0, 0), (1, 1), (1, 1)))     # (B,N,Cin,Hp,Wp)
    s = s.reshape(B, N, Cin, Hp * Wp)
    s = jnp.pad(s, ((0, 0), (0, 0), (0, Cin_p - Cin), (0, Lpad - Hp * Wp)))
    s = s.astype(jnp.bfloat16)                                   # halve HBM read

    # Weights: (B, Cout_p8, 9*Cin_p8), k = (dy*3+dx)*Cin_p8 + ci, zero-padded.
    wt = jnp.transpose(w, (0, 4, 1, 2, 3)).reshape(B, Cout, 9, Cin)
    wt = jnp.pad(wt, ((0, 0), (0, Cout_p - Cout), (0, 0), (0, Cin_p - Cin)))
    wm = wt.reshape(B, Cout_p, K).astype(jnp.float32)

    gamma_p = jnp.pad(gamma, ((0, 0), (0, Cout_p - Cout)))[..., None]  # (B,Cout_p,1)
    beta_p = jnp.pad(beta, ((0, 0), (0, Cout_p - Cout)))[..., None]

    # VMEM footprint (double-buffered ins/outs + scratch) -> scoped limit.
    slab_b = N * Cin_p * Lpad * 2
    out_b = N * Cout_p * Mlanes * 4
    w_b = Cout_p * K * 4
    needed = (2 * (slab_b + w_b + out_b) + K * Mlanes * 4
              + N * Cout_p * Mlanes * 4 + (4 << 20))
    vmem_limit = _vmem_limit_bytes(needed)

    kernel = functools.partial(
        grm_branch_kernel,
        n_imgs=N, cin_p=Cin_p, wp=Wp, w_img=W, hwp=H * Wp, m_lanes=Mlanes,
        inv_count=1.0 / float(N * H * W))

    out_pad = pl.pallas_call(
        kernel,
        grid=(B,),
        in_specs=[
            pl.BlockSpec((None, N, Cin_p, Lpad), lambda b: (b, 0, 0, 0)),
            pl.BlockSpec((None, Cout_p, K), lambda b: (b, 0, 0)),
            pl.BlockSpec((None, Cout_p, 1), lambda b: (b, 0, 0)),
            pl.BlockSpec((None, Cout_p, 1), lambda b: (b, 0, 0)),
        ],
        out_specs=pl.BlockSpec((None, N, Cout_p, Mlanes), lambda b: (b, 0, 0, 0)),
        out_shape=jax.ShapeDtypeStruct((B, N, Cout_p, Mlanes), jnp.float32),
        scratch_shapes=[
            pltpu.VMEM((K, Mlanes), jnp.float32),          # im2col tile
            pltpu.VMEM((N, Cout_p, Mlanes), jnp.float32),  # pre-BN conv outputs
        ],
        compiler_params=pltpu.CompilerParams(
            dimension_semantics=("parallel",),
            vmem_limit_bytes=vmem_limit),
    )(s, wm, gamma_p, beta_p)

    # ---- epilogue: carve out valid channels/pixels; already NCHW ----
    out = out_pad[:, :, :Cout, :H * Wp].reshape(B, N, Cout, H, Wp)[..., :W]
    return out                                               # (B, N, Cout, H, W)


# ---------------- module forward ----------------

def guided_refinement_forward_pallas(d5, d4, d3, d2, d5_p, d4_p, d3_p, d2_p, params):
    xs = (d5, d4, d3, d2)
    xps = (d5_p, d4_p, d3_p, d2_p)
    outs = [None] * 4
    # Branches with identical shapes are stacked and run through ONE pallas_call
    # (leading grid axis = branch) to cut launches and keep >=2 grid steps for
    # megacore sharding.
    groups = {}
    for i, xv in enumerate(xs):
        groups.setdefault(xv.shape, []).append(i)
    for idxs in groups.values():
        x_stack = jnp.stack([xs[i] for i in idxs])
        xp_stack = jnp.stack([xps[i] for i in idxs])
        w_stack = jnp.stack([params[_BRANCH_NAMES[i]]['w'] for i in idxs])
        g_stack = jnp.stack([params[_BRANCH_NAMES[i]]['gamma'] for i in idxs])
        b_stack = jnp.stack([params[_BRANCH_NAMES[i]]['beta'] for i in idxs])
        y_stack = _branches_conv_bn_relu(x_stack, xp_stack, w_stack, g_stack, b_stack)
        for k, i in enumerate(idxs):
            outs[i] = y_stack[k]
    return tuple(outs)


def init_params(key, in_d, out_d):
    ks = jax.random.split(key, 4)

    def branch(k):
        return dict(
            w=0.1 * jax.random.normal(k, (3, 3, in_d, out_d), jnp.float32),  # HWIO
            # Conv bias: kept in the reference; it is a no-op through
            # training-mode BN, so the Pallas kernel drops it.
            b=0.01 * jnp.arange(out_d, dtype=jnp.float32),
            gamma=1.0 + 0.05 * jnp.arange(out_d, dtype=jnp.float32),
            beta=0.02 * jnp.arange(out_d, dtype=jnp.float32) - 0.03,
        )

    return {name: branch(k) for name, k in zip(_BRANCH_NAMES, ks)}


# ---------------- pure-JAX reference (correctness check) ----------------

def _branch_ref(x, x_p, p):
    s = jnp.transpose(x + x_p, (0, 2, 3, 1))   # NCHW -> NHWC
    y = lax.conv_general_dilated(
        s, p['w'], (1, 1), 'SAME',
        dimension_numbers=('NHWC', 'HWIO', 'NHWC')) + p['b']
    mean = jnp.mean(y, axis=(0, 1, 2), keepdims=True)
    var = jnp.mean((y - mean) ** 2, axis=(0, 1, 2), keepdims=True)
    y = jnp.maximum((y - mean) * lax.rsqrt(var + EPS) * p['gamma'] + p['beta'], 0.0)
    return jnp.transpose(y, (0, 3, 1, 2))


def guided_refinement_forward_ref(d5, d4, d3, d2, d5_p, d4_p, d3_p, d2_p, params):
    xs = (d5, d4, d3, d2)
    xps = (d5_p, d4_p, d3_p, d2_p)
    return tuple(_branch_ref(xs[i], xps[i], params[_BRANCH_NAMES[i]]) for i in range(4))


if __name__ == "__main__":
    key = jax.random.PRNGKey(0)
    N, C, H, W = 2, 4, 16, 16   # in_d = 4
    OUT_D = 8                   # out_d = 8

    ks = jax.random.split(key, 9)
    d5, d4, d3, d2 = (jax.random.normal(ks[i], (N, C, H, W), jnp.float32)
                      for i in range(4))
    d5_p, d4_p, d3_p, d2_p = (jax.random.normal(ks[4 + i], (N, C, H, W), jnp.float32)
                              for i in range(4))
    params = init_params(ks[8], C, OUT_D)

    outs = jax.block_until_ready(
        guided_refinement_forward_pallas(d5, d4, d3, d2, d5_p, d4_p, d3_p, d2_p, params))
    refs = jax.block_until_ready(
        guided_refinement_forward_ref(d5, d4, d3, d2, d5_p, d4_p, d3_p, d2_p, params))

    for name, o, r in zip(_BRANCH_NAMES, outs, refs):
        assert o.shape == (N, OUT_D, H, W), (name, o.shape)
        # Only error source vs the f32 reference is the bf16-rounded input slab
        # (and default f32 matmul precision); accumulation and BN are f32.
        if not jnp.allclose(o, r, atol=5e-2, rtol=5e-2):
            raise AssertionError(
                f"{name}: mismatch vs reference, max err {jnp.max(jnp.abs(o - r))}")
    print("KERNEL_OK")
</pallas_src>

<mosaic_0001>
module attributes {stable_mosaic.version = 11 : i64} {
  func.func @grm_branch_kernel(%arg0: i32, %arg1: memref<1x2x8x512xbf16, #tpu.memory_space<vmem>>, %arg2: memref<1x8x72xf32, #tpu.memory_space<vmem>>, %arg3: memref<1x8x1xf32, #tpu.memory_space<vmem>>, %arg4: memref<1x8x1xf32, #tpu.memory_space<vmem>>, %arg5: memref<1x2x8x384xf32, #tpu.memory_space<vmem>>, %arg6: memref<72x384xf32, #tpu.memory_space<vmem>>, %arg7: memref<2x8x384xf32, #tpu.memory_space<vmem>>) attributes {dimension_semantics = [#tpu.dimension_semantics<parallel>], iteration_bounds = array<i64: 4>, scalar_prefetch = 0 : i64, scratch_operands = 2 : i64, tpu.core_type = #tpu.core_type<tc>, window_params = [{transform_indices = @transform_0, window_bounds = array<i64: 1, 2, 8, 512>}, {transform_indices = @transform_1, window_bounds = array<i64: 1, 8, 72>}, {transform_indices = @transform_2, window_bounds = array<i64: 1, 8, 1>}, {transform_indices = @transform_3, window_bounds = array<i64: 1, 8, 1>}, {transform_indices = @transform_4, window_bounds = array<i64: 1, 2, 8, 384>}]} {
    %c0 = arith.constant 0 : index
    %c0_0 = arith.constant 0 : index
    %c0_1 = arith.constant 0 : index
    %0 = vector.load %arg2[%c0, %c0_0, %c0_1] : memref<1x8x72xf32, #tpu.memory_space<vmem>>, vector<1x8x72xf32>
    %1 = vector.shape_cast %0 : vector<1x8x72xf32> to vector<8x72xf32>
    %2 = tpu.iota {dimensions = array<i32: 1>} : vector<8x384xi32>
    %c18_i32 = arith.constant 18 : i32
    %c0_i32 = arith.constant 0 : i32
    %3 = arith.cmpi eq, %c18_i32, %c0_i32 : i32
    %c1_i32 = arith.constant 1 : i32
    %4 = arith.select %3, %c1_i32, %c18_i32 : i32
    %5 = vector.broadcast %4 : i32 to vector<8x384xi32>
    %6 = arith.remsi %2, %5 : vector<8x384xi32>
    %c0_i32_2 = arith.constant 0 : i32
    %7 = vector.broadcast %c0_i32_2 : i32 to vector<8x384xi32>
    %8 = arith.cmpi ne, %6, %7 : vector<8x384xi32>
    %c0_i32_3 = arith.constant 0 : i32
    %9 = vector.broadcast %c0_i32_3 : i32 to vector<8x384xi32>
    %10 = arith.cmpi slt, %6, %9 : vector<8x384xi32>
    %c0_i32_4 = arith.constant 0 : i32
    %11 = arith.cmpi slt, %4, %c0_i32_4 : i32
    %12 = vector.broadcast %11 : i1 to vector<8x384xi1>
    %13 = vector.broadcast %12 : vector<8x384xi1> to vector<8x384xi1>
    %14 = arith.xori %10, %13 : vector<8x384xi1>
    %15 = arith.andi %14, %8 : vector<8x384xi1>
    %16 = vector.broadcast %4 : i32 to vector<8x384xi32>
    %17 = arith.addi %6, %16 : vector<8x384xi32>
    %18 = arith.select %15, %17, %6 : vector<8x384xi1>, vector<8x384xi32>
    %c16_i32 = arith.constant 16 : i32
    %19 = vector.broadcast %c16_i32 : i32 to vector<8x384xi32>
    %20 = arith.cmpi slt, %18, %19 : vector<8x384xi32>
    %c288_i32 = arith.constant 288 : i32
    %21 = vector.broadcast %c288_i32 : i32 to vector<8x384xi32>
    %22 = arith.cmpi slt, %2, %21 : vector<8x384xi32>
    %23 = arith.andi %20, %22 : vector<8x384xi1>
    %cst = arith.constant 0.000000e+00 : f32
    %24 = vector.broadcast %cst : f32 to vector<8x1xf32>
    %cst_5 = arith.constant 0.000000e+00 : f32
    %25 = vector.broadcast %cst_5 : f32 to vector<8x1xf32>
    %c0_6 = arith.constant 0 : index
    %c0_7 = arith.constant 0 : index
    %c0_8 = arith.constant 0 : index
    %c0_9 = arith.constant 0 : index
    %26 = vector.load %arg1[%c0_6, %c0_7, %c0_8, %c0_9] : memref<1x2x8x512xbf16, #tpu.memory_space<vmem>>, vector<1x1x8x384xbf16>
    %27 = vector.shape_cast %26 : vector<1x1x8x384xbf16> to vector<8x384xbf16>
    %28 = arith.extf %27 : vector<8x384xbf16> to vector<8x384xf32>
    %c0_10 = arith.constant 0 : index
    %c0_11 = arith.constant 0 : index
    %29 = vector.load %arg6[%c0_10, %c0_11] : memref<72x384xf32, #tpu.memory_space<vmem>>, vector<8x384xf32>
    tpu.vector_store %arg6[%c0_10, %c0_11], %28 {strides = array<i32>} : memref<72x384xf32, #tpu.memory_space<vmem>>, vector<8x384xf32>,
    %c0_12 = arith.constant 0 : index
    %c0_13 = arith.constant 0 : index
    %c0_14 = arith.constant 0 : index
    %c1 = arith.constant 1 : index
    %30 = vector.load %arg1[%c0_12, %c0_13, %c0_14, %c1] : memref<1x2x8x512xbf16, #tpu.memory_space<vmem>>, vector<1x1x8x384xbf16>
    %31 = vector.shape_cast %30 : vector<1x1x8x384xbf16> to vector<8x384xbf16>
    %32 = arith.extf %31 : vector<8x384xbf16> to vector<8x384xf32>
    %c8 = arith.constant 8 : index
    %c0_15 = arith.constant 0 : index
    %33 = vector.load %arg6[%c8, %c0_15] : memref<72x384xf32, #tpu.memory_space<vmem>>, vector<8x384xf32>
    tpu.vector_store %arg6[%c8, %c0_15], %32 {strides = array<i32>} : memref<72x384xf32, #tpu.memory_space<vmem>>, vector<8x384xf32>,
    %c0_16 = arith.constant 0 : index
    %c0_17 = arith.constant 0 : index
    %c0_18 = arith.constant 0 : index
    %c2 = arith.constant 2 : index
    %34 = vector.load %arg1[%c0_16, %c0_17, %c0_18, %c2] : memref<1x2x8x512xbf16, #tpu.memory_space<vmem>>, vector<1x1x8x384xbf16>
    %35 = vector.shape_cast %34 : vector<1x1x8x384xbf16> to vector<8x384xbf16>
    %36 = arith.extf %35 : vector<8x384xbf16> to vector<8x384xf32>
    %c16 = arith.constant 16 : index
    %c0_19 = arith.constant 0 : index
    %37 = vector.load %arg6[%c16, %c0_19] : memref<72x384xf32, #tpu.memory_space<vmem>>, vector<8x384xf32>
    tpu.vector_store %arg6[%c16, %c0_19], %36 {strides = array<i32>} : memref<72x384xf32, #tpu.memory_space<vmem>>, vector<8x384xf32>,
    %c0_20 = arith.constant 0 : index
    %c0_21 = arith.constant 0 : index
    %c0_22 = arith.constant 0 : index
    %c18 = arith.constant 18 : index
    %38 = vector.load %arg1[%c0_20, %c0_21, %c0_22, %c18] : memref<1x2x8x512xbf16, #tpu.memory_space<vmem>>, vector<1x1x8x384xbf16>
    %39 = vector.shape_cast %38 : vector<1x1x8x384xbf16> to vector<8x384xbf16>
    %40 = arith.extf %39 : vector<8x384xbf16> to vector<8x384xf32>
    %c24 = arith.constant 24 : index
    %c0_23 = arith.constant 0 : index
    %41 = vector.load %arg6[%c24, %c0_23] : memref<72x384xf32, #tpu.memory_space<vmem>>, vector<8x384xf32>
    tpu.vector_store %arg6[%c24, %c0_23], %40 {strides = array<i32>} : memref<72x384xf32, #tpu.memory_space<vmem>>, vector<8x384xf32>,
    %c0_24 = arith.constant 0 : index
    %c0_25 = arith.constant 0 : index
    %c0_26 = arith.constant 0 : index
    %c19 = arith.constant 19 : index
    %42 = vector.load %arg1[%c0_24, %c0_25, %c0_26, %c19] : memref<1x2x8x512xbf16, #tpu.memory_space<vmem>>, vector<1x1x8x384xbf16>
    %43 = vector.shape_cast %42 : vector<1x1x8x384xbf16> to vector<8x384xbf16>
    %44 = arith.extf %43 : vector<8x384xbf16> to vector<8x384xf32>
    %c32 = arith.constant 32 : index
    %c0_27 = arith.constant 0 : index
    %45 = vector.load %arg6[%c32, %c0_27] : memref<72x384xf32, #tpu.memory_space<vmem>>, vector<8x384xf32>
    tpu.vector_store %arg6[%c32, %c0_27], %44 {strides = array<i32>} : memref<72x384xf32, #tpu.memory_space<vmem>>, vector<8x384xf32>,
    %c0_28 = arith.constant 0 : index
    %c0_29 = arith.constant 0 : index
    %c0_30 = arith.constant 0 : index
    %c20 = arith.constant 20 : index
    %46 = vector.load %arg1[%c0_28, %c0_29, %c0_30, %c20] : memref<1x2x8x512xbf16, #tpu.memory_space<vmem>>, vector<1x1x8x384xbf16>
    %47 = vector.shape_cast %46 : vector<1x1x8x384xbf16> to vector<8x384xbf16>
    %48 = arith.extf %47 : vector<8x384xbf16> to vector<8x384xf32>
    %c40 = arith.constant 40 : index
    %c0_31 = arith.constant 0 : index
    %49 = vector.load %arg6[%c40, %c0_31] : memref<72x384xf32, #tpu.memory_space<vmem>>, vector<8x384xf32>
    tpu.vector_store %arg6[%c40, %c0_31], %48 {strides = array<i32>} : memref<72x384xf32, #tpu.memory_space<vmem>>, vector<8x384xf32>,
    %c0_32 = arith.constant 0 : index
    %c0_33 = arith.constant 0 : index
    %c0_34 = arith.constant 0 : index
    %c36 = arith.constant 36 : index
    %50 = vector.load %arg1[%c0_32, %c0_33, %c0_34, %c36] : memref<1x2x8x512xbf16, #tpu.memory_space<vmem>>, vector<1x1x8x384xbf16>
    %51 = vector.shape_cast %50 : vector<1x1x8x384xbf16> to vector<8x384xbf16>
    %52 = arith.extf %51 : vector<8x384xbf16> to vector<8x384xf32>
    %c48 = arith.constant 48 : index
    %c0_35 = arith.constant 0 : index
    %53 = vector.load %arg6[%c48, %c0_35] : memref<72x384xf32, #tpu.memory_space<vmem>>, vector<8x384xf32>
    tpu.vector_store %arg6[%c48, %c0_35], %52 {strides = array<i32>} : memref<72x384xf32, #tpu.memory_space<vmem>>, vector<8x384xf32>,
    %c0_36 = arith.constant 0 : index
    %c0_37 = arith.constant 0 : index
    %c0_38 = arith.constant 0 : index
    %c37 = arith.constant 37 : index
    %54 = vector.load %arg1[%c0_36, %c0_37, %c0_38, %c37] : memref<1x2x8x512xbf16, #tpu.memory_space<vmem>>, vector<1x1x8x384xbf16>
    %55 = vector.shape_cast %54 : vector<1x1x8x384xbf16> to vector<8x384xbf16>
    %56 = arith.extf %55 : vector<8x384xbf16> to vector<8x384xf32>
    %c56 = arith.constant 56 : index
    %c0_39 = arith.constant 0 : index
    %57 = vector.load %arg6[%c56, %c0_39] : memref<72x384xf32, #tpu.memory_space<vmem>>, vector<8x384xf32>
    tpu.vector_store %arg6[%c56, %c0_39], %56 {strides = array<i32>} : memref<72x384xf32, #tpu.memory_space<vmem>>, vector<8x384xf32>,
    %c0_40 = arith.constant 0 : index
    %c0_41 = arith.constant 0 : index
    %c0_42 = arith.constant 0 : index
    %c38 = arith.constant 38 : index
    %58 = vector.load %arg1[%c0_40, %c0_41, %c0_42, %c38] : memref<1x2x8x512xbf16, #tpu.memory_space<vmem>>, vector<1x1x8x384xbf16>
    %59 = vector.shape_cast %58 : vector<1x1x8x384xbf16> to vector<8x384xbf16>
    %60 = arith.extf %59 : vector<8x384xbf16> to vector<8x384xf32>
    %c64 = arith.constant 64 : index
    %c0_43 = arith.constant 0 : index
    %61 = vector.load %arg6[%c64, %c0_43] : memref<72x384xf32, #tpu.memory_space<vmem>>, vector<8x384xf32>
    tpu.vector_store %arg6[%c64, %c0_43], %60 {strides = array<i32>} : memref<72x384xf32, #tpu.memory_space<vmem>>, vector<8x384xf32>,
    %c0_44 = arith.constant 0 : index
    %c0_45 = arith.constant 0 : index
    %62 = vector.load %arg6[%c0_44, %c0_45] : memref<72x384xf32, #tpu.memory_space<vmem>>, vector<72x384xf32>
    %cst_46 = arith.constant dense<0.000000e+00> : vector<8x384xf32>
    %63 = tpu.matmul %1, %62, %cst_46 {dimension_numbers = #tpu.dot_dimension_numbers<[1], [0], [0], [1], [0, 0, 1, 1], [], []>} : vector<8x72xf32>, vector<72x384xf32>, vector<8x384xf32> -> vector<8x384xf32>
    %c0_47 = arith.constant 0 : index
    %c0_48 = arith.constant 0 : index
    %c0_49 = arith.constant 0 : index
    %64 = vector.load %arg7[%c0_47, %c0_48, %c0_49] : memref<2x8x384xf32, #tpu.memory_space<vmem>>, vector<1x8x384xf32>
    %65 = vector.shape_cast %64 : vector<1x8x384xf32> to vector<8x384xf32>
    %66 = vector.shape_cast %63 : vector<8x384xf32> to vector<1x8x384xf32>
    tpu.vector_store %arg7[%c0_47, %c0_48, %c0_49], %66 {strides = array<i32>} : memref<2x8x384xf32, #tpu.memory_space<vmem>>, vector<1x8x384xf32>,
    %cst_50 = arith.constant 0.000000e+00 : f32
    %67 = vector.broadcast %cst_50 : f32 to vector<8x384xf32>
    %68 = arith.select %23, %63, %67 : vector<8x384xi1>, vector<8x384xf32>
    %cst_51 = arith.constant dense<0.000000e+00> : vector<8xf32>
    %69 = vector.multi_reduction <add>, %68, %cst_51 [1] : vector<8x384xf32> to vector<8xf32>
    %70 = vector.shape_cast %69 : vector<8xf32> to vector<8x1xf32>
    %71 = arith.addf %24, %70 : vector<8x1xf32>
    %72 = arith.mulf %68, %63 : vector<8x384xf32>
    %cst_52 = arith.constant dense<0.000000e+00> : vector<8xf32>
    %73 = vector.multi_reduction <add>, %72, %cst_52 [1] : vector<8x384xf32> to vector<8xf32>
    %74 = vector.shape_cast %73 : vector<8xf32> to vector<8x1xf32>
    %75 = arith.addf %25, %74 : vector<8x1xf32>
    %c0_53 = arith.constant 0 : index
    %c1_54 = arith.constant 1 : index
    %c0_55 = arith.constant 0 : index
    %c0_56 = arith.constant 0 : index
    %76 = vector.load %arg1[%c0_53, %c1_54, %c0_55, %c0_56] : memref<1x2x8x512xbf16, #tpu.memory_space<vmem>>, vector<1x1x8x384xbf16>
    %77 = vector.shape_cast %76 : vector<1x1x8x384xbf16> to vector<8x384xbf16>
    %78 = arith.extf %77 : vector<8x384xbf16> to vector<8x384xf32>
    %c0_57 = arith.constant 0 : index
    %c0_58 = arith.constant 0 : index
    %79 = vector.load %arg6[%c0_57, %c0_58] : memref<72x384xf32, #tpu.memory_space<vmem>>, vector<8x384xf32>
    tpu.vector_store %arg6[%c0_57, %c0_58], %78 {strides = array<i32>} : memref<72x384xf32, #tpu.memory_space<vmem>>, vector<8x384xf32>,
    %c0_59 = arith.constant 0 : index
    %c1_60 = arith.constant 1 : index
    %c0_61 = arith.constant 0 : index
    %c1_62 = arith.constant 1 : index
    %80 = vector.load %arg1[%c0_59, %c1_60, %c0_61, %c1_62] : memref<1x2x8x512xbf16, #tpu.memory_space<vmem>>, vector<1x1x8x384xbf16>
    %81 = vector.shape_cast %80 : vector<1x1x8x384xbf16> to vector<8x384xbf16>
    %82 = arith.extf %81 : vector<8x384xbf16> to vector<8x384xf32>
    %c8_63 = arith.constant 8 : index
    %c0_64 = arith.constant 0 : index
    %83 = vector.load %arg6[%c8_63, %c0_64] : memref<72x384xf32, #tpu.memory_space<vmem>>, vector<8x384xf32>
    tpu.vector_store %arg6[%c8_63, %c0_64], %82 {strides = array<i32>} : memref<72x384xf32, #tpu.memory_space<vmem>>, vector<8x384xf32>,
    %c0_65 = arith.constant 0 : index
    %c1_66 = arith.constant 1 : index
    %c0_67 = arith.constant 0 : index
    %c2_68 = arith.constant 2 : index
    %84 = vector.load %arg1[%c0_65, %c1_66, %c0_67, %c2_68] : memref<1x2x8x512xbf16, #tpu.memory_space<vmem>>, vector<1x1x8x384xbf16>
    %85 = vector.shape_cast %84 : vector<1x1x8x384xbf16> to vector<8x384xbf16>
    %86 = arith.extf %85 : vector<8x384xbf16> to vector<8x384xf32>
    %c16_69 = arith.constant 16 : index
    %c0_70 = arith.constant 0 : index
    %87 = vector.load %arg6[%c16_69, %c0_70] : memref<72x384xf32, #tpu.memory_space<vmem>>, vector<8x384xf32>
    tpu.vector_store %arg6[%c16_69, %c0_70], %86 {strides = array<i32>} : memref<72x384xf32, #tpu.memory_space<vmem>>, vector<8x384xf32>,
    %c0_71 = arith.constant 0 : index
    %c1_72 = arith.constant 1 : index
    %c0_73 = arith.constant 0 : index
    %c18_74 = arith.constant 18 : index
    %88 = vector.load %arg1[%c0_71, %c1_72, %c0_73, %c18_74] : memref<1x2x8x512xbf16, #tpu.memory_space<vmem>>, vector<1x1x8x384xbf16>
    %89 = vector.shape_cast %88 : vector<1x1x8x384xbf16> to vector<8x384xbf16>
    %90 = arith.extf %89 : vector<8x384xbf16> to vector<8x384xf32>
    %c24_75 = arith.constant 24 : index
    %c0_76 = arith.constant 0 : index
    %91 = vector.load %arg6[%c24_75, %c0_76] : memref<72x384xf32, #tpu.memory_space<vmem>>, vector<8x384xf32>
    tpu.vector_store %arg6[%c24_75, %c0_76], %90 {strides = array<i32>} : memref<72x384xf32, #tpu.memory_space<vmem>>, vector<8x384xf32>,
    %c0_77 = arith.constant 0 : index
    %c1_78 = arith.constant 1 : index
    %c0_79 = arith.constant 0 : index
    %c19_80 = arith.constant 19 : index
    %92 = vector.load %arg1[%c0_77, %c1_78, %c0_79, %c19_80] : memref<1x2x8x512xbf16, #tpu.memory_space<vmem>>, vector<1x1x8x384xbf16>
    %93 = vector.shape_cast %92 : vector<1x1x8x384xbf16> to vector<8x384xbf16>
    %94 = arith.extf %93 : vector<8x384xbf16> to vector<8x384xf32>
    %c32_81 = arith.constant 32 : index
    %c0_82 = arith.constant 0 : index
    %95 = vector.load %arg6[%c32_81, %c0_82] : memref<72x384xf32, #tpu.memory_space<vmem>>, vector<8x384xf32>
    tpu.vector_store %arg6[%c32_81, %c0_82], %94 {strides = array<i32>} : memref<72x384xf32, #tpu.memory_space<vmem>>, vector<8x384xf32>,
    %c0_83 = arith.constant 0 : index
    %c1_84 = arith.constant 1 : index
    %c0_85 = arith.constant 0 : index
    %c20_86 = arith.constant 20 : index
    %96 = vector.load %arg1[%c0_83, %c1_84, %c0_85, %c20_86] : memref<1x2x8x512xbf16, #tpu.memory_space<vmem>>, vector<1x1x8x384xbf16>
    %97 = vector.shape_cast %96 : vector<1x1x8x384xbf16> to vector<8x384xbf16>
    %98 = arith.extf %97 : vector<8x384xbf16> to vector<8x384xf32>
    %c40_87 = arith.constant 40 : index
    %c0_88 = arith.constant 0 : index
    %99 = vector.load %arg6[%c40_87, %c0_88] : memref<72x384xf32, #tpu.memory_space<vmem>>, vector<8x384xf32>
    tpu.vector_store %arg6[%c40_87, %c0_88], %98 {strides = array<i32>} : memref<72x384xf32, #tpu.memory_space<vmem>>, vector<8x384xf32>,
    %c0_89 = arith.constant 0 : index
    %c1_90 = arith.constant 1 : index
    %c0_91 = arith.constant 0 : index
    %c36_92 = arith.constant 36 : index
    %100 = vector.load %arg1[%c0_89, %c1_90, %c0_91, %c36_92] : memref<1x2x8x512xbf16, #tpu.memory_space<vmem>>, vector<1x1x8x384xbf16>
    %101 = vector.shape_cast %100 : vector<1x1x8x384xbf16> to vector<8x384xbf16>
    %102 = arith.extf %101 : vector<8x384xbf16> to vector<8x384xf32>
    %c48_93 = arith.constant 48 : index
    %c0_94 = arith.constant 0 : index
    %103 = vector.load %arg6[%c48_93, %c0_94] : memref<72x384xf32, #tpu.memory_space<vmem>>, vector<8x384xf32>
    tpu.vector_store %arg6[%c48_93, %c0_94], %102 {strides = array<i32>} : memref<72x384xf32, #tpu.memory_space<vmem>>, vector<8x384xf32>,
    %c0_95 = arith.constant 0 : index
    %c1_96 = arith.constant 1 : index
    %c0_97 = arith.constant 0 : index
    %c37_98 = arith.constant 37 : index
    %104 = vector.load %arg1[%c0_95, %c1_96, %c0_97, %c37_98] : memref<1x2x8x512xbf16, #tpu.memory_space<vmem>>, vector<1x1x8x384xbf16>
    %105 = vector.shape_cast %104 : vector<1x1x8x384xbf16> to vector<8x384xbf16>
    %106 = arith.extf %105 : vector<8x384xbf16> to vector<8x384xf32>
    %c56_99 = arith.constant 56 : index
    %c0_100 = arith.constant 0 : index
    %107 = vector.load %arg6[%c56_99, %c0_100] : memref<72x384xf32, #tpu.memory_space<vmem>>, vector<8x384xf32>
    tpu.vector_store %arg6[%c56_99, %c0_100], %106 {strides = array<i32>} : memref<72x384xf32, #tpu.memory_space<vmem>>, vector<8x384xf32>,
    %c0_101 = arith.constant 0 : index
    %c1_102 = arith.constant 1 : index
    %c0_103 = arith.constant 0 : index
    %c38_104 = arith.constant 38 : index
    %108 = vector.load %arg1[%c0_101, %c1_102, %c0_103, %c38_104] : memref<1x2x8x512xbf16, #tpu.memory_space<vmem>>, vector<1x1x8x384xbf16>
    %109 = vector.shape_cast %108 : vector<1x1x8x384xbf16> to vector<8x384xbf16>
    %110 = arith.extf %109 : vector<8x384xbf16> to vector<8x384xf32>
    %c64_105 = arith.constant 64 : index
    %c0_106 = arith.constant 0 : index
    %111 = vector.load %arg6[%c64_105, %c0_106] : memref<72x384xf32, #tpu.memory_space<vmem>>, vector<8x384xf32>
    tpu.vector_store %arg6[%c64_105, %c0_106], %110 {strides = array<i32>} : memref<72x384xf32, #tpu.memory_space<vmem>>, vector<8x384xf32>,
    %c0_107 = arith.constant 0 : index
    %c0_108 = arith.constant 0 : index
    %112 = vector.load %arg6[%c0_107, %c0_108] : memref<72x384xf32, #tpu.memory_space<vmem>>, vector<72x384xf32>
    %cst_109 = arith.constant dense<0.000000e+00> : vector<8x384xf32>
    %113 = tpu.matmul %1, %112, %cst_109 {dimension_numbers = #tpu.dot_dimension_numbers<[1], [0], [0], [1], [0, 0, 1, 1], [], []>} : vector<8x72xf32>, vector<72x384xf32>, vector<8x384xf32> -> vector<8x384xf32>
    %c1_110 = arith.constant 1 : index
    %c0_111 = arith.constant 0 : index
    %c0_112 = arith.constant 0 : index
    %114 = vector.load %arg7[%c1_110, %c0_111, %c0_112] : memref<2x8x384xf32, #tpu.memory_space<vmem>>, vector<1x8x384xf32>
    %115 = vector.shape_cast %114 : vector<1x8x384xf32> to vector<8x384xf32>
    %116 = vector.shape_cast %113 : vector<8x384xf32> to vector<1x8x384xf32>
    tpu.vector_store %arg7[%c1_110, %c0_111, %c0_112], %116 {strides = array<i32>} : memref<2x8x384xf32, #tpu.memory_space<vmem>>, vector<1x8x384xf32>,
    %cst_113 = arith.constant 0.000000e+00 : f32
    %117 = vector.broadcast %cst_113 : f32 to vector<8x384xf32>
    %118 = arith.select %23, %113, %117 : vector<8x384xi1>, vector<8x384xf32>
    %cst_114 = arith.constant dense<0.000000e+00> : vector<8xf32>
    %119 = vector.multi_reduction <add>, %118, %cst_114 [1] : vector<8x384xf32> to vector<8xf32>
    %120 = vector.shape_cast %119 : vector<8xf32> to vector<8x1xf32>
    %121 = arith.addf %71, %120 : vector<8x1xf32>
    %122 = arith.mulf %118, %113 : vector<8x384xf32>
    %cst_115 = arith.constant dense<0.000000e+00> : vector<8xf32>
    %123 = vector.multi_reduction <add>, %122, %cst_115 [1] : vector<8x384xf32> to vector<8xf32>
    %124 = vector.shape_cast %123 : vector<8xf32> to vector<8x1xf32>
    %125 = arith.addf %75, %124 : vector<8x1xf32>
    %cst_116 = arith.constant 0.001953125 : f32
    %126 = vector.broadcast %cst_116 : f32 to vector<8x1xf32>
    %127 = arith.mulf %121, %126 : vector<8x1xf32>
    %cst_117 = arith.constant 0.001953125 : f32
    %128 = vector.broadcast %cst_117 : f32 to vector<8x1xf32>
    %129 = arith.mulf %125, %128 : vector<8x1xf32>
    %130 = arith.mulf %127, %127 : vector<8x1xf32>
    %131 = arith.subf %129, %130 : vector<8x1xf32>
    %cst_118 = arith.constant 0.000000e+00 : f32
    %132 = vector.broadcast %cst_118 : f32 to vector<8x1xf32>
    %133 = arith.maximumf %131, %132 : vector<8x1xf32>
    %c0_119 = arith.constant 0 : index
    %c0_120 = arith.constant 0 : index
    %c0_121 = arith.constant 0 : index
    %134 = vector.load %arg3[%c0_119, %c0_120, %c0_121] : memref<1x8x1xf32, #tpu.memory_space<vmem>>, vector<1x8x1xf32>
    %135 = vector.shape_cast %134 : vector<1x8x1xf32> to vector<8x1xf32>
    %cst_122 = arith.constant 9.99999974E-6 : f32
    %136 = vector.broadcast %cst_122 : f32 to vector<8x1xf32>
    %137 = arith.addf %133, %136 : vector<8x1xf32>
    %138 = math.rsqrt %137 : vector<8x1xf32>
    %139 = arith.mulf %135, %138 : vector<8x1xf32>
    %c0_123 = arith.constant 0 : index
    %c0_124 = arith.constant 0 : index
    %c0_125 = arith.constant 0 : index
    %140 = vector.load %arg4[%c0_123, %c0_124, %c0_125] : memref<1x8x1xf32, #tpu.memory_space<vmem>>, vector<1x8x1xf32>
    %141 = vector.shape_cast %140 : vector<1x8x1xf32> to vector<8x1xf32>
    %142 = arith.mulf %127, %139 : vector<8x1xf32>
    %143 = arith.subf %141, %142 : vector<8x1xf32>
    %c0_126 = arith.constant 0 : index
    %c0_127 = arith.constant 0 : index
    %c0_128 = arith.constant 0 : index
    %144 = vector.load %arg7[%c0_126, %c0_127, %c0_128] : memref<2x8x384xf32, #tpu.memory_space<vmem>>, vector<1x8x384xf32>
    %145 = vector.shape_cast %144 : vector<1x8x384xf32> to vector<8x384xf32>
    %146 = vector.broadcast %139 : vector<8x1xf32> to vector<8x384xf32>
    %147 = arith.mulf %145, %146 : vector<8x384xf32>
    %148 = vector.broadcast %143 : vector<8x1xf32> to vector<8x384xf32>
    %149 = arith.addf %147, %148 : vector<8x384xf32>
    %cst_129 = arith.constant 0.000000e+00 : f32
    %150 = vector.broadcast %cst_129 : f32 to vector<8x384xf32>
    %151 = arith.maximumf %149, %150 : vector<8x384xf32>
    %c0_130 = arith.constant 0 : index
    %c0_131 = arith.constant 0 : index
    %c0_132 = arith.constant 0 : index
    %c0_133 = arith.constant 0 : index
    %152 = vector.load %arg5[%c0_130, %c0_131, %c0_132, %c0_133] : memref<1x2x8x384xf32, #tpu.memory_space<vmem>>, vector<1x1x8x384xf32>
    %153 = vector.shape_cast %152 : vector<1x1x8x384xf32> to vector<8x384xf32>
    %154 = vector.shape_cast %151 : vector<8x384xf32> to vector<1x1x8x384xf32>
    tpu.vector_store %arg5[%c0_130, %c0_131, %c0_132, %c0_133], %154 {strides = array<i32>} : memref<1x2x8x384xf32, #tpu.memory_space<vmem>>, vector<1x1x8x384xf32>,
    %c1_134 = arith.constant 1 : index
    %c0_135 = arith.constant 0 : index
    %c0_136 = arith.constant 0 : index
    %155 = vector.load %arg7[%c1_134, %c0_135, %c0_136] : memref<2x8x384xf32, #tpu.memory_space<vmem>>, vector<1x8x384xf32>
    %156 = vector.shape_cast %155 : vector<1x8x384xf32> to vector<8x384xf32>
    %157 = vector.broadcast %139 : vector<8x1xf32> to vector<8x384xf32>
    %158 = arith.mulf %156, %157 : vector<8x384xf32>
    %159 = vector.broadcast %143 : vector<8x1xf32> to vector<8x384xf32>
    %160 = arith.addf %158, %159 : vector<8x384xf32>
    %cst_137 = arith.constant 0.000000e+00 : f32
    %161 = vector.broadcast %cst_137 : f32 to vector<8x384xf32>
    %162 = arith.maximumf %160, %161 : vector<8x384xf32>
    %c0_138 = arith.constant 0 : index
    %c1_139 = arith.constant 1 : index
    %c0_140 = arith.constant 0 : index
    %c0_141 = arith.constant 0 : index
    %163 = vector.load %arg5[%c0_138, %c1_139, %c0_140, %c0_141] : memref<1x2x8x384xf32, #tpu.memory_space<vmem>>, vector<1x1x8x384xf32>
    %164 = vector.shape_cast %163 : vector<1x1x8x384xf32> to vector<8x384xf32>
    %165 = vector.shape_cast %162 : vector<8x384xf32> to vector<1x1x8x384xf32>
    tpu.vector_store %arg5[%c0_138, %c1_139, %c0_140, %c0_141], %165 {strides = array<i32>} : memref<1x2x8x384xf32, #tpu.memory_space<vmem>>, vector<1x1x8x384xf32>,
    return
  }
  func.func @transform_0(%arg0: i32) -> (i32, i32, i32, i32) {
    %c0_i32 = arith.constant 0 : i32
    %c0_i32_0 = arith.constant 0 : i32
    %c0_i32_1 = arith.constant 0 : i32
    %c0_i32_2 = arith.constant 0 : i32
    return %arg0, %c0_i32, %c0_i32_0, %c0_i32_1 : i32, i32, i32, i32
  }
  func.func @transform_1(%arg0: i32) -> (i32, i32, i32) {
    %c0_i32 = arith.constant 0 : i32
    %c0_i32_0 = arith.constant 0 : i32
    %c0_i32_1 = arith.constant 0 : i32
    return %arg0, %c0_i32, %c0_i32_0 : i32, i32, i32
  }
  func.func @transform_2(%arg0: i32) -> (i32, i32, i32) {
    %c0_i32 = arith.constant 0 : i32
    %c0_i32_0 = arith.constant 0 : i32
    %c0_i32_1 = arith.constant 0 : i32
    return %arg0, %c0_i32, %c0_i32_0 : i32, i32, i32
  }
  func.func @transform_3(%arg0: i32) -> (i32, i32, i32) {
    %c0_i32 = arith.constant 0 : i32
    %c0_i32_0 = arith.constant 0 : i32
    %c0_i32_1 = arith.constant 0 : i32
    return %arg0, %c0_i32, %c0_i32_0 : i32, i32, i32
  }
  func.func @transform_4(%arg0: i32) -> (i32, i32, i32, i32) {
    %c0_i32 = arith.constant 0 : i32
    %c0_i32_0 = arith.constant 0 : i32
    %c0_i32_1 = arith.constant 0 : i32
    %c0_i32_2 = arith.constant 0 : i32
    return %arg0, %c0_i32, %c0_i32_0, %c0_i32_1 : i32, i32, i32, i32
  }
}

</mosaic_0001>

<llo_original>
// kernel: tpu_custom_call.1
$region0: #{tpu_custom_call.1}
  #allocation0 [shape = 'u32[]', space=smem, size = 0x4, offset = 0x4, fixed_abs, tag = 'smem constant byte address 0x4 - core index']
  #allocation1 [shape = 'u32[144,128]{1,0:T(1,128)}', space=vmem, size = 0x12000, scoped, tag = 'internal scratch']
  #allocation2 [shape = 'f32[72,384]{1,0:T(8,128)}', space=vmem, size = 0x1b000, scoped, tag = 'scratch operand']
  #allocation3 [shape = 'f32[2,8,384]{2,1,0:T(8,128)}', space=vmem, size = 0x6000, scoped, tag = 'scratch operand']
  %s0 = inlined_call_operand.hbm [shape: bf16[4,2,8,512], index: 0, kind: input, shape index: {}]
  %s1 = inlined_call_operand.vmem [shape: f32[4,8,72], index: 1, kind: input, shape index: {}]
  %s2 = inlined_call_operand.vmem [shape: f32[4,8,1], index: 2, kind: input, shape index: {}]
  %s3 = inlined_call_operand.vmem [shape: f32[4,8,1], index: 3, kind: input, shape index: {}]
  %s4 = inlined_call_operand.hbm [shape: f32[4,2,8,384], index: 4, kind: output, shape index: {}]
  %s5 = sld [smem:[#allocation0]]
  $region53: #{tpu_custom_call.1} parent=0
    _
  %s7 = ssub.s32 1, %s5
  %s8 = scalar_select 0, %s7, %s5
  $region1: #{tpu_custom_call.1} parent=0
    #allocation4 [shape = 'u8[32768]{0}', space=vmem, size = 0x8000, scoped, tag = 'input window, operand 0']
    #allocation5 [shape = 's32[2]{0}', space=sflag, size = 0x8, scoped, tag = 'scoped memory for tpu_custom_call.1']
    #allocation6 [shape = 's32[2]{0}', space=sflag, size = 0x8, scoped, tag = 'scoped memory for tpu_custom_call.1']
    #allocation7 [shape = 'u8[49152]{0}', space=vmem, size = 0xc000, scoped, tag = 'output window, operand 0']
    %9 = vsyncpa [#allocation5], 0
    %s10 = scalar_lea.sflag [#allocation5], 1
    %11 = vsyncpa %s10, 0
    %12 = vsyncpa [#allocation6], 0
    %s13 = scalar_lea.sflag [#allocation6], 1
    %14 = vsyncpa %s13, 0
    loop: start=0, step=1, limit=6
    $region2: #{tpu_custom_call.1} parent=1 // loop_pre_header
      _
    $region3: #{tpu_custom_call.1} parent=1 // loop_header
      %s16 = sphi 0, %s20
      %p17 = scmp.ge.s32.totalorder %s16, 6
      %s26 = sphi 0, %s28
      %s29 = sphi 0, %s26
      %s30 = sphi 0, %s29
      %s46 = sphi 0, %s30
      %s52 = sphi 0, %s54
      %s55 = sphi 0, %s52
      %s56 = sphi 0, %s55
      %s72 = sphi 0, %s56
      %s78 = sphi 0, %s80
      %s81 = sphi 0, %s78
      %s82 = sphi 0, %s81
      %s98 = sphi 0, %s82
      %s104 = sphi 0, %s106
      %s107 = sphi 0, %s104
      %s108 = sphi 0, %s107
      %s124 = sphi 0, %s108
      %s130 = sphi 0, %s132
      %s133 = sphi 0, %s130
      %s134 = sphi 0, %s133
      %s150 = sphi 0, %s134
    $region4: #{tpu_custom_call.1} parent=1 // loop_header_branch
      %19 = sbr.rel (%p17) target = $region8
    $region5: #{tpu_custom_call.1} parent=1 // loop_body
      %s21 = ssub.s32 %s16, 1
      %s22 = ssub.s32 %s16, 2
      %s23 = sadd.s32 %s16, 1
      %s24 = ssub.s32 %s16, %s23
      %p25 = scmp.eq.s32.totalorder %s24, 0
      %s27 = sadd.s32 %s26, 1
      %s28 = scalar_select %p25, %s26, %s27
      %p31 = pneg %p25
      %p32 = scmp.eq.s32.totalorder %s16, 3
      %p33 = por %p31, %p32
      %p34 = scmp.ne.s32.totalorder %s26, %s29
      %p35 = scmp.eq.s32.totalorder %s16, 0
      %p36 = por %p34, %p35
      %p37 = scmp.ne.s32.totalorder %s26, %s29
      %p38 = scmp.eq.s32.totalorder %s21, 3
      %p39 = por %p37, %p38
      %p40 = scmp.ne.s32.totalorder %s29, %s30
      %p41 = scmp.eq.s32.totalorder %s21, 0
      %p42 = por %p40, %p41
      %p43 = scmp.ne.s32.totalorder %s29, %s30
      %p44 = scmp.eq.s32.totalorder %s22, 3
      %p45 = por %p43, %p44
      %p47 = scmp.ne.s32.totalorder %s30, %s46
      %p48 = scmp.eq.s32.totalorder %s22, 0
      %p49 = por %p47, %p48
      %s50 = ssub.s32 %s16, %s23
      %p51 = scmp.eq.s32.totalorder %s50, 0
      %s53 = sadd.s32 %s52, 1
      %s54 = scalar_select %p51, %s52, %s53
      %p57 = pneg %p51
      %p58 = scmp.eq.s32.totalorder %s16, 3
      %p59 = por %p57, %p58
      %p60 = scmp.ne.s32.totalorder %s52, %s55
      %p61 = scmp.eq.s32.totalorder %s16, 0
      %p62 = por %p60, %p61
      %p63 = scmp.ne.s32.totalorder %s52, %s55
      %p64 = scmp.eq.s32.totalorder %s21, 3
      %p65 = por %p63, %p64
      %p66 = scmp.ne.s32.totalorder %s55, %s56
      %p67 = scmp.eq.s32.totalorder %s21, 0
      %p68 = por %p66, %p67
      %p69 = scmp.ne.s32.totalorder %s55, %s56
      %p70 = scmp.eq.s32.totalorder %s22, 3
      %p71 = por %p69, %p70
      %p73 = scmp.ne.s32.totalorder %s56, %s72
      %p74 = scmp.eq.s32.totalorder %s22, 0
      %p75 = por %p73, %p74
      %s76 = ssub.s32 %s16, %s23
      %p77 = scmp.eq.s32.totalorder %s76, 0
      %s79 = sadd.s32 %s78, 1
      %s80 = scalar_select %p77, %s78, %s79
      %p83 = pneg %p77
      %p84 = scmp.eq.s32.totalorder %s16, 3
      %p85 = por %p83, %p84
      %p86 = scmp.ne.s32.totalorder %s78, %s81
      %p87 = scmp.eq.s32.totalorder %s16, 0
      %p88 = por %p86, %p87
      %p89 = scmp.ne.s32.totalorder %s78, %s81
      %p90 = scmp.eq.s32.totalorder %s21, 3
      %p91 = por %p89, %p90
      %p92 = scmp.ne.s32.totalorder %s81, %s82
      %p93 = scmp.eq.s32.totalorder %s21, 0
      %p94 = por %p92, %p93
      %p95 = scmp.ne.s32.totalorder %s81, %s82
      %p96 = scmp.eq.s32.totalorder %s22, 3
      %p97 = por %p95, %p96
      %p99 = scmp.ne.s32.totalorder %s82, %s98
      %p100 = scmp.eq.s32.totalorder %s22, 0
      %p101 = por %p99, %p100
      %s102 = ssub.s32 %s16, %s23
      %p103 = scmp.eq.s32.totalorder %s102, 0
      %s105 = sadd.s32 %s104, 1
      %s106 = scalar_select %p103, %s104, %s105
      %p109 = pneg %p103
      %p110 = scmp.eq.s32.totalorder %s16, 3
      %p111 = por %p109, %p110
      %p112 = scmp.ne.s32.totalorder %s104, %s107
      %p113 = scmp.eq.s32.totalorder %s16, 0
      %p114 = por %p112, %p113
      %p115 = scmp.ne.s32.totalorder %s104, %s107
      %p116 = scmp.eq.s32.totalorder %s21, 3
      %p117 = por %p115, %p116
      %p118 = scmp.ne.s32.totalorder %s107, %s108
      %p119 = scmp.eq.s32.totalorder %s21, 0
      %p120 = por %p118, %p119
      %p121 = scmp.ne.s32.totalorder %s107, %s108
      %p122 = scmp.eq.s32.totalorder %s22, 3
      %p123 = por %p121, %p122
      %p125 = scmp.ne.s32.totalorder %s108, %s124
      %p126 = scmp.eq.s32.totalorder %s22, 0
      %p127 = por %p125, %p126
      %s128 = ssub.s32 %s16, %s23
      %p129 = scmp.eq.s32.totalorder %s128, 0
      %s131 = sadd.s32 %s130, 1
      %s132 = scalar_select %p129, %s130, %s131
      %p135 = pneg %p129
      %p136 = scmp.eq.s32.totalorder %s16, 3
      %p137 = por %p135, %p136
      %p138 = scmp.ne.s32.totalorder %s130, %s133
      %p139 = scmp.eq.s32.totalorder %s16, 0
      %p140 = por %p138, %p139
      %p141 = scmp.ne.s32.totalorder %s130, %s133
      %p142 = scmp.eq.s32.totalorder %s21, 3
      %p143 = por %p141, %p142
      %p144 = scmp.ne.s32.totalorder %s133, %s134
      %p145 = scmp.eq.s32.totalorder %s21, 0
      %p146 = por %p144, %p145
      %p147 = scmp.ne.s32.totalorder %s133, %s134
      %p148 = scmp.eq.s32.totalorder %s22, 3
      %p149 = por %p147, %p148
      %p151 = scmp.ne.s32.totalorder %s134, %s150
      %p152 = scmp.eq.s32.totalorder %s22, 0
      %p153 = por %p151, %p152
      %p154 = scmp.le.s32.totalorder 1, %s16
      %p155 = scmp.lt.s32.totalorder %s16, 5
      %p156 = pnand %p154, %p155
      %p157 = pneg %p156
      // Predicated region
      $region9: #{tpu_custom_call.1} parent=5 // pred_check
        _
      $region10: #{tpu_custom_call.1} parent=5 // pred_check_branch
        %159 = sbr.rel (%p156) target = $region12
      $region11: #{tpu_custom_call.1} parent=5 // pred_region
        %s160 = ssub.s32 %s16, 1
      $region12: #{tpu_custom_call.1} parent=5 // pred_fallthru
        _
      %p161 = scmp.lt.s32.totalorder %s16, 4
      // Predicated region
      $region13: #{tpu_custom_call.1} parent=5 // pred_check
        %p162 = pneg %p161
      $region14: #{tpu_custom_call.1} parent=5 // pred_check_branch
        %164 = sbr.rel (%p162) target = $region16
      $region15: #{tpu_custom_call.1} parent=5 // pred_region
        // Predicated region
        $region17: #{tpu_custom_call.1} parent=15 // pred_check
          %p165 = pneg %p36
        $region18: #{tpu_custom_call.1} parent=15 // pred_check_branch
          %167 = sbr.rel (%p165) target = $region20
        $region19: #{tpu_custom_call.1} parent=15 // pred_region
          %s168 = sand.u32 %s26, 1
          %s169 = scalar_lea.sflag [#allocation5], %s168
          %s170 = sand.u32 %s26, 1
          %s171 = smul.addr %s170, 32
          %s172 = scalar_lea.vmem [#allocation4], %s171
          %s174 = ssub.s32 512, 512
          %175 = vsyncadd %s169, %s174
          %s176 = smul.addr %s16, 8
          %s177 = smul.addr %s176, 64
          %s178 = scalar_lea.hbm %s0, %s177
          %s179 = sshll.u32 %s172, 4
          %s180 = int_to_ptr.vmem [resolvable:$true] %s179
          %185 = dma.hbm_to_vmem [thread:$0]  %s178, 512, %s180, %s169, 256, 256, 16
        $region20: #{tpu_custom_call.1} parent=15 // pred_fallthru
          _
        // Predicated region
        $region21: #{tpu_custom_call.1} parent=15 // pred_check
          %p186 = pneg %p62
        $region22: #{tpu_custom_call.1} parent=15 // pred_check_branch
          %188 = sbr.rel (%p186) target = $region24
        $region23: #{tpu_custom_call.1} parent=15 // pred_region
          %p189 = scmp.lt.s32.totalorder %s16, 3
          %s190 = scalar_select %p189, %s16, 3
          %s191 = smul.addr %s190, 8
          %s192 = scalar_lea.vmem %s1, %s191
        $region24: #{tpu_custom_call.1} parent=15 // pred_fallthru
          _
        // Predicated region
        $region25: #{tpu_custom_call.1} parent=15 // pred_check
          %p193 = pneg %p88
        $region26: #{tpu_custom_call.1} parent=15 // pred_check_branch
          %195 = sbr.rel (%p193) target = $region28
        $region27: #{tpu_custom_call.1} parent=15 // pred_region
          %p196 = scmp.lt.s32.totalorder %s16, 3
          %s197 = scalar_select %p196, %s16, 3
          %s198 = smul.addr %s197, 8
          %s199 = scalar_lea.vmem %s2, %s198
        $region28: #{tpu_custom_call.1} parent=15 // pred_fallthru
          _
        // Predicated region
        $region29: #{tpu_custom_call.1} parent=15 // pred_check
          %p200 = pneg %p114
        $region30: #{tpu_custom_call.1} parent=15 // pred_check_branch
          %202 = sbr.rel (%p200) target = $region32
        $region31: #{tpu_custom_call.1} parent=15 // pred_region
          %p203 = scmp.lt.s32.totalorder %s16, 3
          %s204 = scalar_select %p203, %s16, 3
          %s205 = smul.addr %s204, 8
          %s206 = scalar_lea.vmem %s3, %s205
        $region32: #{tpu_custom_call.1} parent=15 // pred_fallthru
          _
      $region16: #{tpu_custom_call.1} parent=5 // pred_fallthru
        _
      %p207 = scmp.le.s32.totalorder 1, %s16
      %p208 = scmp.lt.s32.totalorder %s16, 5
      %p209 = pnand %p207, %p208
      %p210 = pneg %p209
      // Predicated region
      $region33: #{tpu_custom_call.1} parent=5 // pred_check
        _
      $region34: #{tpu_custom_call.1} parent=5 // pred_check_branch
        %212 = sbr.rel (%p209) target = $region36
      $region35: #{tpu_custom_call.1} parent=5 // pred_region
        %s213 = ssub.s32 %s16, 1
        %s214 = sand.u32 %s29, 1
        %s215 = scalar_lea.sflag [#allocation5], %s214
        %s216 = sand.u32 %s29, 1
        %s217 = smul.addr %s216, 32
        %s218 = scalar_lea.vmem [#allocation4], %s217
        // Predicated region
        $region37: #{tpu_custom_call.1} parent=35 // pred_check
          %p219 = pneg %p42
        $region38: #{tpu_custom_call.1} parent=35 // pred_check_branch
          %221 = sbr.rel (%p219) target = $region40
        $region39: #{tpu_custom_call.1} parent=35 // pred_region
          %222 = dma.done %s215, 512
        $region40: #{tpu_custom_call.1} parent=35 // pred_fallthru
          _
        %s223 = sand.u32 %s29, 1
        %s224 = scalar_lea.sflag [#allocation5], %s223
        %s225 = sand.u32 %s29, 1
        %s226 = smul.addr %s225, 32
        %s227 = scalar_lea.vmem [#allocation4], %s226
        %p228 = pneg %p42
        %p229 = pneg %p39
        %p230 = scmp.lt.s32.totalorder %s21, 3
        %s231 = scalar_select %p230, %s21, 3
        %s232 = smul.addr %s231, 8
        %s233 = scalar_lea.vmem %s1, %s232
        %p234 = pneg %p68
        %p235 = pneg %p65
        %p236 = scmp.lt.s32.totalorder %s21, 3
        %s237 = scalar_select %p236, %s21, 3
        %s238 = smul.addr %s237, 8
        %s239 = scalar_lea.vmem %s2, %s238
        %p240 = pneg %p94
        %p241 = pneg %p91
        %p242 = scmp.lt.s32.totalorder %s21, 3
        %s243 = scalar_select %p242, %s21, 3
        %s244 = smul.addr %s243, 8
        %s245 = scalar_lea.vmem %s3, %s244
        %p246 = pneg %p120
        %p247 = pneg %p117
        %p248 = pneg %p146
        %p249 = pneg %p143
        %s250 = sand.u32 %s133, 1
        %s251 = scalar_lea.sflag [#allocation6], %s250
        %s252 = sand.u32 %s133, 1
        %s253 = smul.addr %s252, 48
        %s254 = scalar_lea.vmem [#allocation7], %s253
        %p255 = scmp.lt.s32.totalorder %s21, 3
        %s256 = scalar_select %p255, %s21, 3
        %s257 = smul.addr %s256, 8
        %s258 = scalar_lea.vmem %s1, %s257
        %p259 = scmp.lt.s32.totalorder %s21, 3
        %s260 = scalar_select %p259, %s21, 3
        %s261 = smul.addr %s260, 8
        %s262 = scalar_lea.vmem %s2, %s261
        %p263 = scmp.lt.s32.totalorder %s21, 3
        %s264 = scalar_select %p263, %s21, 3
        %s265 = smul.addr %s264, 8
        %s266 = scalar_lea.vmem %s3, %s265
        %v267 = vld [vmem:[%s258] sm:$0xff]
        %v268 = vlaneseq
        %v269 = vand.u32 %v268, 127
        %v270 = vadd.s32 %v269, 128
        %v271 = vadd.s32 %v269, 256
        %vm272 = vcmp.lt.s32.totalorder %v269, 0
        %v273 = vsub.s32 0, %v269
        %v274 = vsel %vm272, %v273, %v269
        %v275 = vmul.u32.u64.compose %v274, 3817748708
        %v276 = vextract.low.u32 %v275
        %v277 = vextract.high.u32 %v275
        %v278 = vshrl.u32 %v277, 4
        %v279 = vmul.u32 %v278, 18
        %v280 = vsub.s32 %v274, %v279
        %v281 = vsub.s32 0, %v280
        %v282 = vsel %vm272, %v281, %v280
        %vm283 = vcmp.lt.s32.totalorder %v270, 0
        %v284 = vsub.s32 0, %v270
        %v285 = vsel %vm283, %v284, %v270
        %v286 = vmul.u32.u64.compose %v285, 3817748708
        %v287 = vextract.low.u32 %v286
        %v288 = vextract.high.u32 %v286
        %v289 = vshrl.u32 %v288, 4
        %v290 = vmul.u32 %v289, 18
        %v291 = vsub.s32 %v285, %v290
        %v292 = vsub.s32 0, %v291
        %v293 = vsel %vm283, %v292, %v291
        %vm294 = vcmp.lt.s32.totalorder %v271, 0
        %v295 = vsub.s32 0, %v271
        %v296 = vsel %vm294, %v295, %v271
        %v297 = vmul.u32.u64.compose %v296, 3817748708
        %v298 = vextract.low.u32 %v297
        %v299 = vextract.high.u32 %v297
        %v300 = vshrl.u32 %v299, 4
        %v301 = vmul.u32 %v300, 18
        %v302 = vsub.s32 %v296, %v301
        %v303 = vsub.s32 0, %v302
        %v304 = vsel %vm294, %v303, %v302
        %vm305 = vcmp.ne.s32.totalorder %v282, 0
        %vm306 = vcmp.ne.s32.totalorder %v293, 0
        %vm307 = vcmp.ne.s32.totalorder %v304, 0
        %vm308 = vcmp.lt.s32.totalorder %v282, 0
        %vm309 = vcmp.lt.s32.totalorder %v293, 0
        %vm310 = vcmp.lt.s32.totalorder %v304, 0
        %vm311 = vmand %vm308, %vm305
        %vm312 = vmand %vm309, %vm306
        %vm313 = vmand %vm310, %vm307
        %v314 = vadd.s32 %v282, 18
        %v315 = vadd.s32 %v293, 18
        %v316 = vadd.s32 %v304, 18
        %v317 = vsel %vm311, %v314, %v282
        %v318 = vsel %vm312, %v315, %v293
        %v319 = vsel %vm313, %v316, %v304
        %vm320 = vcmp.lt.s32.totalorder %v317, 16
        %vm321 = vcmp.lt.s32.totalorder %v318, 16
        %vm322 = vcmp.lt.s32.totalorder %v319, 16
        %vm323 = vcmp.lt.s32.totalorder %v269, 288
        %vm324 = vcmp.lt.s32.totalorder %v270, 288
        %vm325 = vcmp.lt.s32.totalorder %v271, 288
        %vm326 = vmand %vm320, %vm323
        %vm327 = vmand %vm321, %vm324
        %vm328 = vmand %vm322, %vm325
        %v329 = vld [vmem:[%s218] sm:$0xff]
        %v330 = vld [vmem:[%s218 + $0x8] sm:$0xf]
        %v331 = vunpack.c.l.bf16 %v329
        %v332 = vunpack.c.h.bf16 %v329
        %v333 = vunpack.c.l.bf16 %v330
        %334 = vst [vmem:[#allocation2] sm:$0xff] %v331
        %335 = vst [vmem:[#allocation2 + $0x8] sm:$0xff] %v332
        %336 = vst [vmem:[#allocation2 + $0x10] sm:$0xff] %v333
        %v337 = vld [vmem:[%s218] sm:$0xff]
        %v338 = vld [vmem:[%s218 + $0x8] sm:$0xff]
        %v339 = vunpack.c.l.bf16 %v337
        %v340 = vunpack.c.h.bf16 %v337
        %v341 = vunpack.c.l.bf16 %v338
        %v342 = vunpack.c.h.bf16 %v338
        %347 = vrot.lane.b32.xlu0 %v339, 127
        %v348 = vpop.permute.xlu0 %347
        %349 = vrot.lane.b32.xlu0 %v340, 127
        %v350 = vpop.permute.xlu0 %349
        %351 = vrot.lane.b32.xlu0 %v341, 127
        %v352 = vpop.permute.xlu0 %351
        %353 = vrot.lane.b32.xlu0 %v342, 127
        %v354 = vpop.permute.xlu0 %353
        %vm355 = vcmask 1039360
        %v356 = vsel %vm355, %v348, %v350
        %v357 = vsel %vm355, %v350, %v352
        %v358 = vsel %vm355, %v352, %v354
        %362 = vst [vmem:[#allocation2 + $0x18] sm:$0xff] %v356
        %363 = vst [vmem:[#allocation2 + $0x20] sm:$0xff] %v357
        %364 = vst [vmem:[#allocation2 + $0x28] sm:$0xff] %v358
        %v365 = vld [vmem:[%s218] sm:$0xff]
        %v366 = vld [vmem:[%s218 + $0x8] sm:$0xff]
        %v367 = vunpack.c.l.bf16 %v365
        %v368 = vunpack.c.h.bf16 %v365
        %v369 = vunpack.c.l.bf16 %v366
        %v370 = vunpack.c.h.bf16 %v366
        %375 = vrot.lane.b32.xlu0 %v367, 126
        %v376 = vpop.permute.xlu0 %375
        %377 = vrot.lane.b32.xlu0 %v368, 126
        %v378 = vpop.permute.xlu0 %377
        %379 = vrot.lane.b32.xlu0 %v369, 126
        %v380 = vpop.permute.xlu0 %379
        %381 = vrot.lane.b32.xlu0 %v370, 126
        %v382 = vpop.permute.xlu0 %381
        %vm383 = vcmask 1031168
        %v384 = vsel %vm383, %v376, %v378
        %v385 = vsel %vm383, %v378, %v380
        %v386 = vsel %vm383, %v380, %v382
        %390 = vst [vmem:[#allocation2 + $0x30] sm:$0xff] %v384
        %391 = vst [vmem:[#allocation2 + $0x38] sm:$0xff] %v385
        %392 = vst [vmem:[#allocation2 + $0x40] sm:$0xff] %v386
        %v393 = vld [vmem:[%s218] sm:$0xff]
        %v394 = vld [vmem:[%s218 + $0x8] sm:$0xff]
        %v395 = vunpack.c.l.bf16 %v393
        %v396 = vunpack.c.h.bf16 %v393
        %v397 = vunpack.c.l.bf16 %v394
        %v398 = vunpack.c.h.bf16 %v394
        %403 = vrot.lane.b32.xlu0 %v395, 110
        %v404 = vpop.permute.xlu0 %403
        %405 = vrot.lane.b32.xlu0 %v396, 110
        %v406 = vpop.permute.xlu0 %405
        %407 = vrot.lane.b32.xlu0 %v397, 110
        %v408 = vpop.permute.xlu0 %407
        %409 = vrot.lane.b32.xlu0 %v398, 110
        %v410 = vpop.permute.xlu0 %409
        %vm411 = vcmask 900096
        %v412 = vsel %vm411, %v404, %v406
        %v413 = vsel %vm411, %v406, %v408
        %v414 = vsel %vm411, %v408, %v410
        %418 = vst [vmem:[#allocation2 + $0x48] sm:$0xff] %v412
        %419 = vst [vmem:[#allocation2 + $0x50] sm:$0xff] %v413
        %420 = vst [vmem:[#allocation2 + $0x58] sm:$0xff] %v414
        %v421 = vld [vmem:[%s218] sm:$0xff]
        %v422 = vld [vmem:[%s218 + $0x8] sm:$0xff]
        %v423 = vunpack.c.l.bf16 %v421
        %v424 = vunpack.c.h.bf16 %v421
        %v425 = vunpack.c.l.bf16 %v422
        %v426 = vunpack.c.h.bf16 %v422
        %431 = vrot.lane.b32.xlu0 %v423, 109
        %v432 = vpop.permute.xlu0 %431
        %433 = vrot.lane.b32.xlu0 %v424, 109
        %v434 = vpop.permute.xlu0 %433
        %435 = vrot.lane.b32.xlu0 %v425, 109
        %v436 = vpop.permute.xlu0 %435
        %437 = vrot.lane.b32.xlu0 %v426, 109
        %v438 = vpop.permute.xlu0 %437
        %vm439 = vcmask 891904
        %v440 = vsel %vm439, %v432, %v434
        %v441 = vsel %vm439, %v434, %v436
        %v442 = vsel %vm439, %v436, %v438
        %446 = vst [vmem:[#allocation2 + $0x60] sm:$0xff] %v440
        %447 = vst [vmem:[#allocation2 + $0x68] sm:$0xff] %v441
        %448 = vst [vmem:[#allocation2 + $0x70] sm:$0xff] %v442
        %v449 = vld [vmem:[%s218] sm:$0xff]
        %v450 = vld [vmem:[%s218 + $0x8] sm:$0xff]
        %v451 = vunpack.c.l.bf16 %v449
        %v452 = vunpack.c.h.bf16 %v449
        %v453 = vunpack.c.l.bf16 %v450
        %v454 = vunpack.c.h.bf16 %v450
        %459 = vrot.lane.b32.xlu0 %v451, 108
        %v460 = vpop.permute.xlu0 %459
        %461 = vrot.lane.b32.xlu0 %v452, 108
        %v462 = vpop.permute.xlu0 %461
        %463 = vrot.lane.b32.xlu0 %v453, 108
        %v464 = vpop.permute.xlu0 %463
        %465 = vrot.lane.b32.xlu0 %v454, 108
        %v466 = vpop.permute.xlu0 %465
        %vm467 = vcmask 883712
        %v468 = vsel %vm467, %v460, %v462
        %v469 = vsel %vm467, %v462, %v464
        %v470 = vsel %vm467, %v464, %v466
        %474 = vst [vmem:[#allocation2 + $0x78] sm:$0xff] %v468
        %475 = vst [vmem:[#allocation2 + $0x80] sm:$0xff] %v469
        %476 = vst [vmem:[#allocation2 + $0x88] sm:$0xff] %v470
        %v477 = vld [vmem:[%s218] sm:$0xff]
        %v478 = vld [vmem:[%s218 + $0x8] sm:$0xff]
        %v479 = vunpack.c.l.bf16 %v477
        %v480 = vunpack.c.h.bf16 %v477
        %v481 = vunpack.c.l.bf16 %v478
        %v482 = vunpack.c.h.bf16 %v478
        %487 = vrot.lane.b32.xlu0 %v479, 92
        %v488 = vpop.permute.xlu0 %487
        %489 = vrot.lane.b32.xlu0 %v480, 92
        %v490 = vpop.permute.xlu0 %489
        %491 = vrot.lane.b32.xlu0 %v481, 92
        %v492 = vpop.permute.xlu0 %491
        %493 = vrot.lane.b32.xlu0 %v482, 92
        %v494 = vpop.permute.xlu0 %493
        %vm495 = vcmask 752640
        %v496 = vsel %vm495, %v488, %v490
        %v497 = vsel %vm495, %v490, %v492
        %v498 = vsel %vm495, %v492, %v494
        %502 = vst [vmem:[#allocation2 + $0x90] sm:$0xff] %v496
        %503 = vst [vmem:[#allocation2 + $0x98] sm:$0xff] %v497
        %504 = vst [vmem:[#allocation2 + $0xa0] sm:$0xff] %v498
        %v505 = vld [vmem:[%s218] sm:$0xff]
        %v506 = vld [vmem:[%s218 + $0x8] sm:$0xff]
        %v507 = vunpack.c.l.bf16 %v505
        %v508 = vunpack.c.h.bf16 %v505
        %v509 = vunpack.c.l.bf16 %v506
        %v510 = vunpack.c.h.bf16 %v506
        %515 = vrot.lane.b32.xlu0 %v507, 91
        %v516 = vpop.permute.xlu0 %515
        %517 = vrot.lane.b32.xlu0 %v508, 91
        %v518 = vpop.permute.xlu0 %517
        %519 = vrot.lane.b32.xlu0 %v509, 91
        %v520 = vpop.permute.xlu0 %519
        %521 = vrot.lane.b32.xlu0 %v510, 91
        %v522 = vpop.permute.xlu0 %521
        %vm523 = vcmask 744448
        %v524 = vsel %vm523, %v516, %v518
        %v525 = vsel %vm523, %v518, %v520
        %v526 = vsel %vm523, %v520, %v522
        %530 = vst [vmem:[#allocation2 + $0xa8] sm:$0xff] %v524
        %531 = vst [vmem:[#allocation2 + $0xb0] sm:$0xff] %v525
        %532 = vst [vmem:[#allocation2 + $0xb8] sm:$0xff] %v526
        %v533 = vld [vmem:[%s218] sm:$0xff]
        %v534 = vld [vmem:[%s218 + $0x8] sm:$0xff]
        %v535 = vunpack.c.l.bf16 %v533
        %v536 = vunpack.c.h.bf16 %v533
        %v537 = vunpack.c.l.bf16 %v534
        %v538 = vunpack.c.h.bf16 %v534
        %543 = vrot.lane.b32.xlu0 %v535, 90
        %v544 = vpop.permute.xlu0 %543
        %545 = vrot.lane.b32.xlu0 %v536, 90
        %v546 = vpop.permute.xlu0 %545
        %547 = vrot.lane.b32.xlu0 %v537, 90
        %v548 = vpop.permute.xlu0 %547
        %549 = vrot.lane.b32.xlu0 %v538, 90
        %v550 = vpop.permute.xlu0 %549
        %vm551 = vcmask 736256
        %v552 = vsel %vm551, %v544, %v546
        %v553 = vsel %vm551, %v546, %v548
        %v554 = vsel %vm551, %v548, %v550
        %558 = vst [vmem:[#allocation2 + $0xc0] sm:$0xff] %v552
        %559 = vst [vmem:[#allocation2 + $0xc8] sm:$0xff] %v553
        %560 = vst [vmem:[#allocation2 + $0xd0] sm:$0xff] %v554
        %v561 = vld [vmem:[#allocation2] sm:$0xff]
        %v562 = vld [vmem:[#allocation2 + $0x8] sm:$0xff]
        %v563 = vld [vmem:[#allocation2 + $0x10] sm:$0xff]
        %v564 = vld [vmem:[#allocation2 + $0x18] sm:$0xff]
        %v565 = vld [vmem:[#allocation2 + $0x20] sm:$0xff]
        %v566 = vld [vmem:[#allocation2 + $0x28] sm:$0xff]
        %v567 = vld [vmem:[#allocation2 + $0x30] sm:$0xff]
        %v568 = vld [vmem:[#allocation2 + $0x38] sm:$0xff]
        %v569 = vld [vmem:[#allocation2 + $0x40] sm:$0xff]
        %v570 = vld [vmem:[#allocation2 + $0x48] sm:$0xff]
        %v571 = vld [vmem:[#allocation2 + $0x50] sm:$0xff]
        %v572 = vld [vmem:[#allocation2 + $0x58] sm:$0xff]
        %v573 = vld [vmem:[#allocation2 + $0x60] sm:$0xff]
        %v574 = vld [vmem:[#allocation2 + $0x68] sm:$0xff]
        %v575 = vld [vmem:[#allocation2 + $0x70] sm:$0xff]
        %v576 = vld [vmem:[#allocation2 + $0x78] sm:$0xff]
        %v577 = vld [vmem:[#allocation2 + $0x80] sm:$0xff]
        %v578 = vld [vmem:[#allocation2 + $0x88] sm:$0xff]
        %v579 = vld [vmem:[#allocation2 + $0x90] sm:$0xff]
        %v580 = vld [vmem:[#allocation2 + $0x98] sm:$0xff]
        %v581 = vld [vmem:[#allocation2 + $0xa0] sm:$0xff]
        %v582 = vld [vmem:[#allocation2 + $0xa8] sm:$0xff]
        %v583 = vld [vmem:[#allocation2 + $0xb0] sm:$0xff]
        %v584 = vld [vmem:[#allocation2 + $0xb8] sm:$0xff]
        %v585 = vld [vmem:[#allocation2 + $0xc0] sm:$0xff]
        %v586 = vld [vmem:[#allocation2 + $0xc8] sm:$0xff]
        %v587 = vld [vmem:[#allocation2 + $0xd0] sm:$0xff]
        %vm588 = vcmask 588800
        %v590 = vsel %vm588, %v267, 0
        %592 = vmatprep.subr.mxu0 %v562
        %593 = vmatpush1.msra.mxu0 %v561
        %594 = vmatprep.subr.mxu0 %v565
        %595 = vmatpush1.msra.mxu0 %v564
        %596 = vmatprep.subr.mxu0 %v568
        %597 = vmatpush1.msra.mxu0 %v567
        %598 = vmatprep.subr.mxu0 %v571
        %599 = vmatpush1.msra.mxu0 %v570
        %600 = vmatprep.subr.mxu0 %v574
        %601 = vmatpush1.msra.mxu0 %v573
        %602 = vmatprep.subr.mxu0 %v577
        %603 = vmatpush1.msra.mxu0 %v576
        %604 = vmatprep.subr.mxu0 %v580
        %605 = vmatpush1.msra.mxu0 %v579
        %606 = vmatprep.subr.mxu0 %v583
        %607 = vmatpush1.msra.mxu0 %v582
        %608 = vmatprep.subr.mxu0 %v586
        %609 = vmatpush1.msra.mxu0 %v585
        %610 = vmatprep.subr.mxu0 0.0
        %611 = vmatpush1.msra.mxu0 0.0
        %612 = vmatprep.subr.mxu0 0.0
        %613 = vmatpush1.msra.mxu0 0.0
        %614 = vmatprep.subr.mxu0 0.0
        %615 = vmatpush1.msra.mxu0 0.0
        %616 = vmatprep.subr.mxu0 0.0
        %617 = vmatpush1.msra.mxu0 0.0
        %618 = vmatprep.subr.mxu0 0.0
        %619 = vmatpush1.msra.mxu0 0.0
        %620 = vmatprep.subr.mxu0 0.0
        %621 = vmatpush1.msra.mxu0 0.0
        %622 = vmatprep.subr.mxu0 0.0
        %623 = vmatpush1.msra.mxu0 0.0
        %624 = vmatprep.subr.mxu0 0.0
        %625 = vmatpush1.msra.mxu0 0.0
        %626 = vmatprep.subr.mxu0 0.0
        %627 = vmatpush1.msra.mxu0 0.0
        %628 = vmatprep.subr.mxu0 0.0
        %629 = vmatpush1.msra.mxu0 0.0
        %630 = vmatprep.subr.mxu0 0.0
        %631 = vmatpush1.msra.mxu0 0.0
        %632 = vmatprep.subr.mxu0 0.0
        %633 = vmatpush1.msra.mxu0 0.0
        %634 = vmatprep.subr.mxu0 0.0
        %635 = vmatpush1.msra.mxu0 0.0
        %636 = vmatprep.subr.mxu0 0.0
        %637 = vmatpush1.msra.mxu0 0.0
        %638 = vmatprep.subr.mxu0 0.0
        %639 = vmatpush1.msra.mxu0 0.0
        %640 = vmatprep.subr.mxu0 0.0
        %641 = vmatpush1.msra.mxu0 0.0
        %642 = vmatprep.subr.mxu0 0.0
        %643 = vmatpush1.msra.mxu0 0.0
        %644 = vmatprep.subr.mxu0 0.0
        %645 = vmatpush1.msra.mxu0 0.0
        %646 = vmatprep.subr.mxu0 0.0
        %647 = vmatpush1.msra.mxu0 0.0
        %648 = vmatprep.subr.mxu0 0.0
        %649 = vmatpush1.msra.mxu0 0.0
        %650 = vmatprep.subr.mxu0 0.0
        %651 = vmatpush1.msra.mxu0 0.0
        %652 = vmatprep.subr.mxu0 0.0
        %653 = vmatpush1.msra.mxu0 0.0
        %654 = vmatprep.subr.mxu0 0.0
        %655 = vmatpush1.msra.mxu0 0.0
        %656 = vmatprep.mubr.f32.mxu0 0.0
        %657 = vmatmul.mubr.f32.gmra.mrb[0].mxu0 %v590
        %v658 = vpop.f32.mrb[0].mxu0
        %v659 = vadd.f32 0.0, %v658
        %v660 = vpop.f32.mrb[0].mxu0
        %v661 = vadd.f32 0.0, %v660
        %662 = vdwg.mxu0
        %663 = vmatprep.subr.mxu0 0.0
        %664 = vmatpush1.msra.mxu0 %v563
        %665 = vmatprep.subr.mxu0 0.0
        %666 = vmatpush1.msra.mxu0 %v566
        %667 = vmatprep.subr.mxu0 0.0
        %668 = vmatpush1.msra.mxu0 %v569
        %669 = vmatprep.subr.mxu0 0.0
        %670 = vmatpush1.msra.mxu0 %v572
        %671 = vmatprep.subr.mxu0 0.0
        %672 = vmatpush1.msra.mxu0 %v575
        %673 = vmatprep.subr.mxu0 0.0
        %674 = vmatpush1.msra.mxu0 %v578
        %675 = vmatprep.subr.mxu0 0.0
        %676 = vmatpush1.msra.mxu0 %v581
        %677 = vmatprep.subr.mxu0 0.0
        %678 = vmatpush1.msra.mxu0 %v584
        %679 = vmatprep.subr.mxu0 0.0
        %680 = vmatpush1.msra.mxu0 %v587
        %681 = vmatprep.subr.mxu0 0.0
        %682 = vmatpush1.msra.mxu0 0.0
        %683 = vmatprep.subr.mxu0 0.0
        %684 = vmatpush1.msra.mxu0 0.0
        %685 = vmatprep.subr.mxu0 0.0
        %686 = vmatpush1.msra.mxu0 0.0
        %687 = vmatprep.subr.mxu0 0.0
        %688 = vmatpush1.msra.mxu0 0.0
        %689 = vmatprep.subr.mxu0 0.0
        %690 = vmatpush1.msra.mxu0 0.0
        %691 = vmatprep.subr.mxu0 0.0
        %692 = vmatpush1.msra.mxu0 0.0
        %693 = vmatprep.subr.mxu0 0.0
        %694 = vmatpush1.msra.mxu0 0.0
        %695 = vmatprep.subr.mxu0 0.0
        %696 = vmatpush1.msra.mxu0 0.0
        %697 = vmatprep.subr.mxu0 0.0
        %698 = vmatpush1.msra.mxu0 0.0
        %699 = vmatprep.subr.mxu0 0.0
        %700 = vmatpush1.msra.mxu0 0.0
        %701 = vmatprep.subr.mxu0 0.0
        %702 = vmatpush1.msra.mxu0 0.0
        %703 = vmatprep.subr.mxu0 0.0
        %704 = vmatpush1.msra.mxu0 0.0
        %705 = vmatprep.subr.mxu0 0.0
        %706 = vmatpush1.msra.mxu0 0.0
        %707 = vmatprep.subr.mxu0 0.0
        %708 = vmatpush1.msra.mxu0 0.0
        %709 = vmatprep.subr.mxu0 0.0
        %710 = vmatpush1.msra.mxu0 0.0
        %711 = vmatprep.subr.mxu0 0.0
        %712 = vmatpush1.msra.mxu0 0.0
        %713 = vmatprep.subr.mxu0 0.0
        %714 = vmatpush1.msra.mxu0 0.0
        %715 = vmatprep.subr.mxu0 0.0
        %716 = vmatpush1.msra.mxu0 0.0
        %717 = vmatprep.subr.mxu0 0.0
        %718 = vmatpush1.msra.mxu0 0.0
        %719 = vmatprep.subr.mxu0 0.0
        %720 = vmatpush1.msra.mxu0 0.0
        %721 = vmatprep.subr.mxu0 0.0
        %722 = vmatpush1.msra.mxu0 0.0
        %723 = vmatprep.subr.mxu0 0.0
        %724 = vmatpush1.msra.mxu0 0.0
        %725 = vmatprep.subr.mxu0 0.0
        %726 = vmatpush1.msra.mxu0 0.0
        %727 = vmatprep.mubr.f32.mxu0 0.0
        %728 = vmatmul.mubr.f32.gmra.mrb[0].mxu0 %v590
        %v729 = vpop.f32.mrb[0].mxu0
        %v730 = vadd.f32 0.0, %v729
        %v731 = vpop.f32.mrb[0].mxu0
        %732 = vdwg.mxu0
        %733 = vst [vmem:[#allocation3] sm:$0xff] %v659
        %734 = vst [vmem:[#allocation3 + $0x8] sm:$0xff] %v661
        %735 = vst [vmem:[#allocation3 + $0x10] sm:$0xff] %v730
        %v736 = vsel %vm326, %v659, 0.0
        %v737 = vsel %vm327, %v661, 0.0
        %v738 = vsel %vm328, %v730, 0.0
        %v739 = vadd.f32 %v736, %v737
        %v740 = vadd.f32 %v739, %v738
        %741 = vadd.xlane.f32.xlu0 %v740
        %v742 = vpop.xlane.xlu0 %741
        %v743 = vadd.f32 %v742, 0.0
        %v744 = vmul.f32 %v736, %v659
        %v745 = vmul.f32 %v737, %v661
        %v746 = vmul.f32 %v738, %v730
        %v747 = vadd.f32 %v744, %v745
        %v748 = vadd.f32 %v747, %v746
        %749 = vadd.xlane.f32.xlu0 %v748
        %v750 = vpop.xlane.xlu0 %749
        %v751 = vadd.f32 %v750, 0.0
        %s752 = scalar_lea.vmem %s218, 16 [#allocation4]
        %v753 = vld [vmem:[%s752] sm:$0xff]
        %v754 = vld [vmem:[%s752 + $0x8] sm:$0xf]
        %v755 = vunpack.c.l.bf16 %v753
        %v756 = vunpack.c.h.bf16 %v753
        %v757 = vunpack.c.l.bf16 %v754
        %758 = vst [vmem:[#allocation2] sm:$0xff] %v755
        %759 = vst [vmem:[#allocation2 + $0x8] sm:$0xff] %v756
        %760 = vst [vmem:[#allocation2 + $0x10] sm:$0xff] %v757
        %v761 = vld [vmem:[%s752] sm:$0xff]
        %v762 = vld [vmem:[%s752 + $0x8] sm:$0xff]
        %v763 = vunpack.c.l.bf16 %v761
        %v764 = vunpack.c.h.bf16 %v761
        %v765 = vunpack.c.l.bf16 %v762
        %v766 = vunpack.c.h.bf16 %v762
        %771 = vrot.lane.b32.xlu0 %v763, 127
        %v772 = vpop.permute.xlu0 %771
        %773 = vrot.lane.b32.xlu0 %v764, 127
        %v774 = vpop.permute.xlu0 %773
        %775 = vrot.lane.b32.xlu0 %v765, 127
        %v776 = vpop.permute.xlu0 %775
        %777 = vrot.lane.b32.xlu0 %v766, 127
        %v778 = vpop.permute.xlu0 %777
        %v779 = vsel %vm355, %v772, %v774
        %v780 = vsel %vm355, %v774, %v776
        %v781 = vsel %vm355, %v776, %v778
        %785 = vst [vmem:[#allocation2 + $0x18] sm:$0xff] %v779
        %786 = vst [vmem:[#allocation2 + $0x20] sm:$0xff] %v780
        %787 = vst [vmem:[#allocation2 + $0x28] sm:$0xff] %v781
        %v788 = vld [vmem:[%s752] sm:$0xff]
        %v789 = vld [vmem:[%s752 + $0x8] sm:$0xff]
        %v790 = vunpack.c.l.bf16 %v788
        %v791 = vunpack.c.h.bf16 %v788
        %v792 = vunpack.c.l.bf16 %v789
        %v793 = vunpack.c.h.bf16 %v789
        %798 = vrot.lane.b32.xlu0 %v790, 126
        %v799 = vpop.permute.xlu0 %798
        %800 = vrot.lane.b32.xlu0 %v791, 126
        %v801 = vpop.permute.xlu0 %800
        %802 = vrot.lane.b32.xlu0 %v792, 126
        %v803 = vpop.permute.xlu0 %802
        %804 = vrot.lane.b32.xlu0 %v793, 126
        %v805 = vpop.permute.xlu0 %804
        %v806 = vsel %vm383, %v799, %v801
        %v807 = vsel %vm383, %v801, %v803
        %v808 = vsel %vm383, %v803, %v805
        %812 = vst [vmem:[#allocation2 + $0x30] sm:$0xff] %v806
        %813 = vst [vmem:[#allocation2 + $0x38] sm:$0xff] %v807
        %814 = vst [vmem:[#allocation2 + $0x40] sm:$0xff] %v808
        %v815 = vld [vmem:[%s752] sm:$0xff]
        %v816 = vld [vmem:[%s752 + $0x8] sm:$0xff]
        %v817 = vunpack.c.l.bf16 %v815
        %v818 = vunpack.c.h.bf16 %v815
        %v819 = vunpack.c.l.bf16 %v816
        %v820 = vunpack.c.h.bf16 %v816
        %825 = vrot.lane.b32.xlu0 %v817, 110
        %v826 = vpop.permute.xlu0 %825
        %827 = vrot.lane.b32.xlu0 %v818, 110
        %v828 = vpop.permute.xlu0 %827
        %829 = vrot.lane.b32.xlu0 %v819, 110
        %v830 = vpop.permute.xlu0 %829
        %831 = vrot.lane.b32.xlu0 %v820, 110
        %v832 = vpop.permute.xlu0 %831
        %v833 = vsel %vm411, %v826, %v828
        %v834 = vsel %vm411, %v828, %v830
        %v835 = vsel %vm411, %v830, %v832
        %839 = vst [vmem:[#allocation2 + $0x48] sm:$0xff] %v833
        %840 = vst [vmem:[#allocation2 + $0x50] sm:$0xff] %v834
        %841 = vst [vmem:[#allocation2 + $0x58] sm:$0xff] %v835
        %v842 = vld [vmem:[%s752] sm:$0xff]
        %v843 = vld [vmem:[%s752 + $0x8] sm:$0xff]
        %v844 = vunpack.c.l.bf16 %v842
        %v845 = vunpack.c.h.bf16 %v842
        %v846 = vunpack.c.l.bf16 %v843
        %v847 = vunpack.c.h.bf16 %v843
        %852 = vrot.lane.b32.xlu0 %v844, 109
        %v853 = vpop.permute.xlu0 %852
        %854 = vrot.lane.b32.xlu0 %v845, 109
        %v855 = vpop.permute.xlu0 %854
        %856 = vrot.lane.b32.xlu0 %v846, 109
        %v857 = vpop.permute.xlu0 %856
        %858 = vrot.lane.b32.xlu0 %v847, 109
        %v859 = vpop.permute.xlu0 %858
        %v860 = vsel %vm439, %v853, %v855
        %v861 = vsel %vm439, %v855, %v857
        %v862 = vsel %vm439, %v857, %v859
        %866 = vst [vmem:[#allocation2 + $0x60] sm:$0xff] %v860
        %867 = vst [vmem:[#allocation2 + $0x68] sm:$0xff] %v861
        %868 = vst [vmem:[#allocation2 + $0x70] sm:$0xff] %v862
        %v869 = vld [vmem:[%s752] sm:$0xff]
        %v870 = vld [vmem:[%s752 + $0x8] sm:$0xff]
        %v871 = vunpack.c.l.bf16 %v869
        %v872 = vunpack.c.h.bf16 %v869
        %v873 = vunpack.c.l.bf16 %v870
        %v874 = vunpack.c.h.bf16 %v870
        %879 = vrot.lane.b32.xlu0 %v871, 108
        %v880 = vpop.permute.xlu0 %879
        %881 = vrot.lane.b32.xlu0 %v872, 108
        %v882 = vpop.permute.xlu0 %881
        %883 = vrot.lane.b32.xlu0 %v873, 108
        %v884 = vpop.permute.xlu0 %883
        %885 = vrot.lane.b32.xlu0 %v874, 108
        %v886 = vpop.permute.xlu0 %885
        %v887 = vsel %vm467, %v880, %v882
        %v888 = vsel %vm467, %v882, %v884
        %v889 = vsel %vm467, %v884, %v886
        %893 = vst [vmem:[#allocation2 + $0x78] sm:$0xff] %v887
        %894 = vst [vmem:[#allocation2 + $0x80] sm:$0xff] %v888
        %895 = vst [vmem:[#allocation2 + $0x88] sm:$0xff] %v889
        %v896 = vld [vmem:[%s752] sm:$0xff]
        %v897 = vld [vmem:[%s752 + $0x8] sm:$0xff]
        %v898 = vunpack.c.l.bf16 %v896
        %v899 = vunpack.c.h.bf16 %v896
        %v900 = vunpack.c.l.bf16 %v897
        %v901 = vunpack.c.h.bf16 %v897
        %906 = vrot.lane.b32.xlu0 %v898, 92
        %v907 = vpop.permute.xlu0 %906
        %908 = vrot.lane.b32.xlu0 %v899, 92
        %v909 = vpop.permute.xlu0 %908
        %910 = vrot.lane.b32.xlu0 %v900, 92
        %v911 = vpop.permute.xlu0 %910
        %912 = vrot.lane.b32.xlu0 %v901, 92
        %v913 = vpop.permute.xlu0 %912
        %v914 = vsel %vm495, %v907, %v909
        %v915 = vsel %vm495, %v909, %v911
        %v916 = vsel %vm495, %v911, %v913
        %920 = vst [vmem:[#allocation2 + $0x90] sm:$0xff] %v914
        %921 = vst [vmem:[#allocation2 + $0x98] sm:$0xff] %v915
        %922 = vst [vmem:[#allocation2 + $0xa0] sm:$0xff] %v916
        %v923 = vld [vmem:[%s752] sm:$0xff]
        %v924 = vld [vmem:[%s752 + $0x8] sm:$0xff]
        %v925 = vunpack.c.l.bf16 %v923
        %v926 = vunpack.c.h.bf16 %v923
        %v927 = vunpack.c.l.bf16 %v924
        %v928 = vunpack.c.h.bf16 %v924
        %933 = vrot.lane.b32.xlu0 %v925, 91
        %v934 = vpop.permute.xlu0 %933
        %935 = vrot.lane.b32.xlu0 %v926, 91
        %v936 = vpop.permute.xlu0 %935
        %937 = vrot.lane.b32.xlu0 %v927, 91
        %v938 = vpop.permute.xlu0 %937
        %939 = vrot.lane.b32.xlu0 %v928, 91
        %v940 = vpop.permute.xlu0 %939
        %v941 = vsel %vm523, %v934, %v936
        %v942 = vsel %vm523, %v936, %v938
        %v943 = vsel %vm523, %v938, %v940
        %947 = vst [vmem:[#allocation2 + $0xa8] sm:$0xff] %v941
        %948 = vst [vmem:[#allocation2 + $0xb0] sm:$0xff] %v942
        %949 = vst [vmem:[#allocation2 + $0xb8] sm:$0xff] %v943
        %v950 = vld [vmem:[%s752] sm:$0xff]
        %v951 = vld [vmem:[%s752 + $0x8] sm:$0xff]
        %v952 = vunpack.c.l.bf16 %v950
        %v953 = vunpack.c.h.bf16 %v950
        %v954 = vunpack.c.l.bf16 %v951
        %v955 = vunpack.c.h.bf16 %v951
        %960 = vrot.lane.b32.xlu0 %v952, 90
        %v961 = vpop.permute.xlu0 %960
        %962 = vrot.lane.b32.xlu0 %v953, 90
        %v963 = vpop.permute.xlu0 %962
        %964 = vrot.lane.b32.xlu0 %v954, 90
        %v965 = vpop.permute.xlu0 %964
        %966 = vrot.lane.b32.xlu0 %v955, 90
        %v967 = vpop.permute.xlu0 %966
        %v968 = vsel %vm551, %v961, %v963
        %v969 = vsel %vm551, %v963, %v965
        %v970 = vsel %vm551, %v965, %v967
        %974 = vst [vmem:[#allocation2 + $0xc0] sm:$0xff] %v968
        %975 = vst [vmem:[#allocation2 + $0xc8] sm:$0xff] %v969
        %976 = vst [vmem:[#allocation2 + $0xd0] sm:$0xff] %v970
        %v977 = vld [vmem:[#allocation2] sm:$0xff]
        %v978 = vld [vmem:[#allocation2 + $0x8] sm:$0xff]
        %v979 = vld [vmem:[#allocation2 + $0x10] sm:$0xff]
        %v980 = vld [vmem:[#allocation2 + $0x18] sm:$0xff]
        %v981 = vld [vmem:[#allocation2 + $0x20] sm:$0xff]
        %v982 = vld [vmem:[#allocation2 + $0x28] sm:$0xff]
        %v983 = vld [vmem:[#allocation2 + $0x30] sm:$0xff]
        %v984 = vld [vmem:[#allocation2 + $0x38] sm:$0xff]
        %v985 = vld [vmem:[#allocation2 + $0x40] sm:$0xff]
        %v986 = vld [vmem:[#allocation2 + $0x48] sm:$0xff]
        %v987 = vld [vmem:[#allocation2 + $0x50] sm:$0xff]
        %v988 = vld [vmem:[#allocation2 + $0x58] sm:$0xff]
        %v989 = vld [vmem:[#allocation2 + $0x60] sm:$0xff]
        %v990 = vld [vmem:[#allocation2 + $0x68] sm:$0xff]
        %v991 = vld [vmem:[#allocation2 + $0x70] sm:$0xff]
        %v992 = vld [vmem:[#allocation2 + $0x78] sm:$0xff]
        %v993 = vld [vmem:[#allocation2 + $0x80] sm:$0xff]
        %v994 = vld [vmem:[#allocation2 + $0x88] sm:$0xff]
        %v995 = vld [vmem:[#allocation2 + $0x90] sm:$0xff]
        %v996 = vld [vmem:[#allocation2 + $0x98] sm:$0xff]
        %v997 = vld [vmem:[#allocation2 + $0xa0] sm:$0xff]
        %v998 = vld [vmem:[#allocation2 + $0xa8] sm:$0xff]
        %v999 = vld [vmem:[#allocation2 + $0xb0] sm:$0xff]
        %v1000 = vld [vmem:[#allocation2 + $0xb8] sm:$0xff]
        %v1001 = vld [vmem:[#allocation2 + $0xc0] sm:$0xff]
        %v1002 = vld [vmem:[#allocation2 + $0xc8] sm:$0xff]
        %v1003 = vld [vmem:[#allocation2 + $0xd0] sm:$0xff]
        %1004 = vmatprep.subr.mxu0 %v978
        %1005 = vmatpush1.msra.mxu0 %v977
        %1006 = vmatprep.subr.mxu0 %v981
        %1007 = vmatpush1.msra.mxu0 %v980
        %1008 = vmatprep.subr.mxu0 %v984
        %1009 = vmatpush1.msra.mxu0 %v983
        %1010 = vmatprep.subr.mxu0 %v987
        %1011 = vmatpush1.msra.mxu0 %v986
        %1012 = vmatprep.subr.mxu0 %v990
        %1013 = vmatpush1.msra.mxu0 %v989
        %1014 = vmatprep.subr.mxu0 %v993
        %1015 = vmatpush1.msra.mxu0 %v992
        %1016 = vmatprep.subr.mxu0 %v996
        %1017 = vmatpush1.msra.mxu0 %v995
        %1018 = vmatprep.subr.mxu0 %v999
        %1019 = vmatpush1.msra.mxu0 %v998
        %1020 = vmatprep.subr.mxu0 %v1002
        %1021 = vmatpush1.msra.mxu0 %v1001
        %1022 = vmatprep.subr.mxu0 0.0
        %1023 = vmatpush1.msra.mxu0 0.0
        %1024 = vmatprep.subr.mxu0 0.0
        %1025 = vmatpush1.msra.mxu0 0.0
        %1026 = vmatprep.subr.mxu0 0.0
        %1027 = vmatpush1.msra.mxu0 0.0
        %1028 = vmatprep.subr.mxu0 0.0
        %1029 = vmatpush1.msra.mxu0 0.0
        %1030 = vmatprep.subr.mxu0 0.0
        %1031 = vmatpush1.msra.mxu0 0.0
        %1032 = vmatprep.subr.mxu0 0.0
        %1033 = vmatpush1.msra.mxu0 0.0
        %1034 = vmatprep.subr.mxu0 0.0
        %1035 = vmatpush1.msra.mxu0 0.0
        %1036 = vmatprep.subr.mxu0 0.0
        %1037 = vmatpush1.msra.mxu0 0.0
        %1038 = vmatprep.subr.mxu0 0.0
        %1039 = vmatpush1.msra.mxu0 0.0
        %1040 = vmatprep.subr.mxu0 0.0
        %1041 = vmatpush1.msra.mxu0 0.0
        %1042 = vmatprep.subr.mxu0 0.0
        %1043 = vmatpush1.msra.mxu0 0.0
        %1044 = vmatprep.subr.mxu0 0.0
        %1045 = vmatpush1.msra.mxu0 0.0
        %1046 = vmatprep.subr.mxu0 0.0
        %1047 = vmatpush1.msra.mxu0 0.0
        %1048 = vmatprep.subr.mxu0 0.0
        %1049 = vmatpush1.msra.mxu0 0.0
        %1050 = vmatprep.subr.mxu0 0.0
        %1051 = vmatpush1.msra.mxu0 0.0
        %1052 = vmatprep.subr.mxu0 0.0
        %1053 = vmatpush1.msra.mxu0 0.0
        %1054 = vmatprep.subr.mxu0 0.0
        %1055 = vmatpush1.msra.mxu0 0.0
        %1056 = vmatprep.subr.mxu0 0.0
        %1057 = vmatpush1.msra.mxu0 0.0
        %1058 = vmatprep.subr.mxu0 0.0
        %1059 = vmatpush1.msra.mxu0 0.0
        %1060 = vmatprep.subr.mxu0 0.0
        %1061 = vmatpush1.msra.mxu0 0.0
        %1062 = vmatprep.subr.mxu0 0.0
        %1063 = vmatpush1.msra.mxu0 0.0
        %1064 = vmatprep.subr.mxu0 0.0
        %1065 = vmatpush1.msra.mxu0 0.0
        %1066 = vmatprep.subr.mxu0 0.0
        %1067 = vmatpush1.msra.mxu0 0.0
        %1068 = vmatprep.mubr.f32.mxu0 0.0
        %1069 = vmatmul.mubr.f32.gmra.mrb[0].mxu0 %v590
        %v1070 = vpop.f32.mrb[0].mxu0
        %v1071 = vadd.f32 0.0, %v1070
        %v1072 = vpop.f32.mrb[0].mxu0
        %v1073 = vadd.f32 0.0, %v1072
        %1074 = vdwg.mxu0
        %1075 = vmatprep.subr.mxu0 0.0
        %1076 = vmatpush1.msra.mxu0 %v979
        %1077 = vmatprep.subr.mxu0 0.0
        %1078 = vmatpush1.msra.mxu0 %v982
        %1079 = vmatprep.subr.mxu0 0.0
        %1080 = vmatpush1.msra.mxu0 %v985
        %1081 = vmatprep.subr.mxu0 0.0
        %1082 = vmatpush1.msra.mxu0 %v988
        %1083 = vmatprep.subr.mxu0 0.0
        %1084 = vmatpush1.msra.mxu0 %v991
        %1085 = vmatprep.subr.mxu0 0.0
        %1086 = vmatpush1.msra.mxu0 %v994
        %1087 = vmatprep.subr.mxu0 0.0
        %1088 = vmatpush1.msra.mxu0 %v997
        %1089 = vmatprep.subr.mxu0 0.0
        %1090 = vmatpush1.msra.mxu0 %v1000
        %1091 = vmatprep.subr.mxu0 0.0
        %1092 = vmatpush1.msra.mxu0 %v1003
        %1093 = vmatprep.subr.mxu0 0.0
        %1094 = vmatpush1.msra.mxu0 0.0
        %1095 = vmatprep.subr.mxu0 0.0
        %1096 = vmatpush1.msra.mxu0 0.0
        %1097 = vmatprep.subr.mxu0 0.0
        %1098 = vmatpush1.msra.mxu0 0.0
        %1099 = vmatprep.subr.mxu0 0.0
        %1100 = vmatpush1.msra.mxu0 0.0
        %1101 = vmatprep.subr.mxu0 0.0
        %1102 = vmatpush1.msra.mxu0 0.0
        %1103 = vmatprep.subr.mxu0 0.0
        %1104 = vmatpush1.msra.mxu0 0.0
        %1105 = vmatprep.subr.mxu0 0.0
        %1106 = vmatpush1.msra.mxu0 0.0
        %1107 = vmatprep.subr.mxu0 0.0
        %1108 = vmatpush1.msra.mxu0 0.0
        %1109 = vmatprep.subr.mxu0 0.0
        %1110 = vmatpush1.msra.mxu0 0.0
        %1111 = vmatprep.subr.mxu0 0.0
        %1112 = vmatpush1.msra.mxu0 0.0
        %1113 = vmatprep.subr.mxu0 0.0
        %1114 = vmatpush1.msra.mxu0 0.0
        %1115 = vmatprep.subr.mxu0 0.0
        %1116 = vmatpush1.msra.mxu0 0.0
        %1117 = vmatprep.subr.mxu0 0.0
        %1118 = vmatpush1.msra.mxu0 0.0
        %1119 = vmatprep.subr.mxu0 0.0
        %1120 = vmatpush1.msra.mxu0 0.0
        %1121 = vmatprep.subr.mxu0 0.0
        %1122 = vmatpush1.msra.mxu0 0.0
        %1123 = vmatprep.subr.mxu0 0.0
        %1124 = vmatpush1.msra.mxu0 0.0
        %1125 = vmatprep.subr.mxu0 0.0
        %1126 = vmatpush1.msra.mxu0 0.0
        %1127 = vmatprep.subr.mxu0 0.0
        %1128 = vmatpush1.msra.mxu0 0.0
        %1129 = vmatprep.subr.mxu0 0.0
        %1130 = vmatpush1.msra.mxu0 0.0
        %1131 = vmatprep.subr.mxu0 0.0
        %1132 = vmatpush1.msra.mxu0 0.0
        %1133 = vmatprep.subr.mxu0 0.0
        %1134 = vmatpush1.msra.mxu0 0.0
        %1135 = vmatprep.subr.mxu0 0.0
        %1136 = vmatpush1.msra.mxu0 0.0
        %1137 = vmatprep.subr.mxu0 0.0
        %1138 = vmatpush1.msra.mxu0 0.0
        %1139 = vmatprep.mubr.f32.mxu0 0.0
        %1140 = vmatmul.mubr.f32.gmra.mrb[0].mxu0 %v590
        %v1141 = vpop.f32.mrb[0].mxu0
        %v1142 = vadd.f32 0.0, %v1141
        %v1143 = vpop.f32.mrb[0].mxu0
        %1144 = vdwg.mxu0
        %s1145 = scalar_lea.vmem [#allocation3], 24
        %1146 = vst [vmem:[%s1145] sm:$0xff] %v1071
        %1147 = vst [vmem:[%s1145 + $0x8] sm:$0xff] %v1073
        %1148 = vst [vmem:[%s1145 + $0x10] sm:$0xff] %v1142
        %v1149 = vsel %vm326, %v1071, 0.0
        %v1150 = vsel %vm327, %v1073, 0.0
        %v1151 = vsel %vm328, %v1142, 0.0
        %v1152 = vadd.f32 %v1149, %v1150
        %v1153 = vadd.f32 %v1152, %v1151
        %1154 = vadd.xlane.f32.xlu0 %v1153
        %v1155 = vpop.xlane.xlu0 %1154
        %v1156 = vadd.f32 %v743, %v1155
        %v1157 = vmul.f32 %v1149, %v1071
        %v1158 = vmul.f32 %v1150, %v1073
        %v1159 = vmul.f32 %v1151, %v1142
        %v1160 = vadd.f32 %v1157, %v1158
        %v1161 = vadd.f32 %v1160, %v1159
        %1162 = vadd.xlane.f32.xlu0 %v1161
        %v1163 = vpop.xlane.xlu0 %1162
        %v1164 = vadd.f32 %v751, %v1163
        %v1165 = vmul.f32 %v1156, 0.001953125
        %v1166 = vmul.f32 %v1164, 0.001953125
        %v1167 = vmul.f32 %v1165, %v1165
        %v1168 = vsub.f32 %v1166, %v1167
        %v1169 = vmax.f32 %v1168, 0.0
        %v1170 = vld [vmem:[%s262] sm:$0xff]
        %v1171 = vadd.f32 %v1169, 1e-05
        %v1172 = vrsqrt.pop %v1171
        %v1173 = vmul.f32 %v1170, %v1172
        %v1174 = vld [vmem:[%s266] sm:$0xff]
        %v1175 = vmul.f32 %v1165, %v1173
        %v1176 = vsub.f32 %v1174, %v1175
        %v1177 = vld [vmem:[#allocation3] sm:$0xff]
        %v1178 = vld [vmem:[#allocation3 + $0x8] sm:$0xff]
        %v1179 = vld [vmem:[#allocation3 + $0x10] sm:$0xff]
        %1181 = vset.pattern.permute.xlu0 0
        %1182 = vperm.xlu0 %1181, %v1173
        %v1183 = vpop.permute.xlu0 %1182
        %v1185 = vmul.f32 %v1177, %v1183
        %v1186 = vmul.f32 %v1178, %v1183
        %v1187 = vmul.f32 %v1179, %v1183
        %1189 = vset.pattern.permute.xlu0 0
        %1190 = vperm.xlu0 %1189, %v1176
        %v1191 = vpop.permute.xlu0 %1190
        %v1193 = vadd.f32 %v1185, %v1191
        %v1194 = vadd.f32 %v1186, %v1191
        %v1195 = vadd.f32 %v1187, %v1191
        %v1196 = vmax.f32 %v1193, 0.0
        %v1197 = vmax.f32 %v1194, 0.0
        %v1198 = vmax.f32 %v1195, 0.0
        %1199 = vst [vmem:[%s254] sm:$0xff] %v1196
        %1200 = vst [vmem:[%s254 + $0x8] sm:$0xff] %v1197
        %1201 = vst [vmem:[%s254 + $0x10] sm:$0xff] %v1198
        %v1202 = vld [vmem:[%s1145] sm:$0xff]
        %v1203 = vld [vmem:[%s1145 + $0x8] sm:$0xff]
        %v1204 = vld [vmem:[%s1145 + $0x10] sm:$0xff]
        %v1205 = vmul.f32 %v1202, %v1183
        %v1206 = vmul.f32 %v1203, %v1183
        %v1207 = vmul.f32 %v1204, %v1183
        %v1208 = vadd.f32 %v1205, %v1191
        %v1209 = vadd.f32 %v1206, %v1191
        %v1210 = vadd.f32 %v1207, %v1191
        %v1211 = vmax.f32 %v1208, 0.0
        %v1212 = vmax.f32 %v1209, 0.0
        %v1213 = vmax.f32 %v1210, 0.0
        %s1214 = scalar_lea.vmem %s254, 24 [#allocation7]
        %1215 = vst [vmem:[%s1214] sm:$0xff] %v1211
        %1216 = vst [vmem:[%s1214 + $0x8] sm:$0xff] %v1212
        %1217 = vst [vmem:[%s1214 + $0x10] sm:$0xff] %v1213
        %s1218 = sand.u32 %s133, 1
        %s1219 = scalar_lea.sflag [#allocation6], %s1218
        %s1220 = sand.u32 %s133, 1
        %s1221 = smul.addr %s1220, 48
        %s1222 = scalar_lea.vmem [#allocation7], %s1221
        // Predicated region
        $region41: #{tpu_custom_call.1} parent=35 // pred_check
          %p1223 = pneg %p143
        $region42: #{tpu_custom_call.1} parent=35 // pred_check_branch
          %1225 = sbr.rel (%p1223) target = $region44
        $region43: #{tpu_custom_call.1} parent=35 // pred_region
          %s1227 = ssub.s32 768, 768
          %1228 = vsyncadd %s1219, %s1227
          %s1229 = smul.addr %s21, 6
          %s1230 = smul.addr %s1229, 128
          %s1231 = scalar_lea.hbm %s4, %s1230
          %s1232 = sshll.u32 %s1222, 4
          %s1233 = int_to_ptr.vmem [resolvable:$true] %s1232
          %1238 = dma.vmem_to_hbm [thread:$0]  %s1233, 768, %s1231, %s1219, 384, 384, 24
        $region44: #{tpu_custom_call.1} parent=35 // pred_fallthru
          _
      $region36: #{tpu_custom_call.1} parent=5 // pred_fallthru
        _
      %p1239 = scmp.le.s32.totalorder 2, %s16
      // Predicated region
      $region45: #{tpu_custom_call.1} parent=5 // pred_check
        %p1240 = pneg %p1239
      $region46: #{tpu_custom_call.1} parent=5 // pred_check_branch
        %1242 = sbr.rel (%p1240) target = $region48
      $region47: #{tpu_custom_call.1} parent=5 // pred_region
        %s1243 = ssub.s32 %s16, 2
        // Predicated region
        $region49: #{tpu_custom_call.1} parent=47 // pred_check
          %p1244 = pneg %p149
        $region50: #{tpu_custom_call.1} parent=47 // pred_check_branch
          %1246 = sbr.rel (%p1244) target = $region52
        $region51: #{tpu_custom_call.1} parent=47 // pred_region
          %s1247 = sand.u32 %s134, 1
          %s1248 = scalar_lea.sflag [#allocation6], %s1247
          %s1249 = sand.u32 %s134, 1
          %s1250 = smul.addr %s1249, 48
          %s1251 = scalar_lea.vmem [#allocation7], %s1250
          %1252 = dma.done %s1248, 768
        $region52: #{tpu_custom_call.1} parent=47 // pred_fallthru
          _
      $region48: #{tpu_custom_call.1} parent=5 // pred_fallthru
        _
    $region6: #{tpu_custom_call.1} parent=1 // loop_footer
      %s20 = sadd.s32 1, %s16
    $region7: #{tpu_custom_call.1} parent=1 // loop_footer_branch
      %15 = sbr.rel target = $region3
    $region8: #{tpu_custom_call.1} parent=1 // loop_exit
      _
    %1253 = vsyncpa [#allocation5], 1
    %s1254 = scalar_lea.sflag [#allocation5], 1
    %1255 = vsyncpa %s1254, 1
    %1256 = vsyncpa [#allocation6], 1
    %s1257 = scalar_lea.sflag [#allocation6], 1
    %1258 = vsyncpa %s1257, 1

</llo_original>
